<compile_context>
chip_gen: v7x
topology: tpu7x:2x2x1
jax: 0.10.0
libtpu: 0.0.40
codegen_flags: <defaults>
</compile_context>

<pallas_src>
import functools
import jax
import jax.numpy as jnp
from jax.experimental import pallas as pl
from jax.experimental.pallas import tpu as pltpu


# ---------------------------------------------------------------------------
# Helpers
# ---------------------------------------------------------------------------

def _layernorm(v, g, b, eps):
    """f32 LayerNorm over the last axis; g, b broadcast as (1, E)."""
    m = jnp.mean(v, axis=-1, keepdims=True)
    var = jnp.mean(jnp.square(v - m), axis=-1, keepdims=True)
    return (v - m) * jax.lax.rsqrt(var + eps) * g + b


# ---------------------------------------------------------------------------
# Kernel 1: patch embedding + positional embedding + CLS-token prepend
# ---------------------------------------------------------------------------

def _embed_kernel(patches_ref, w_ref, b_ref, pe_ref, cls_ref, o_ref):
    """One batch element: project patches, add PE, prepend CLS row."""
    p = patches_ref[0]                                           # (S0, P) f32
    y = jnp.dot(p.astype(jnp.bfloat16), w_ref[...],              # w is bf16
                preferred_element_type=jnp.float32)
    y = y + b_ref[...] + pe_ref[...]                             # (S0, E) f32
    full = jnp.concatenate([cls_ref[...], y], axis=0)            # (S0+1, E)
    o_ref[0] = full.astype(o_ref.dtype)                          # one full-tile store


def patch_embed_cls(patches, w, b, pe, cls):
    B, S0, P = patches.shape
    E = w.shape[1]
    return pl.pallas_call(
        _embed_kernel,
        grid=(B,),
        in_specs=[pl.BlockSpec((1, S0, P), lambda i: (i, 0, 0)),
                  pl.BlockSpec((P, E), lambda i: (0, 0)),
                  pl.BlockSpec((1, E), lambda i: (0, 0)),
                  pl.BlockSpec((S0, E), lambda i: (0, 0)),
                  pl.BlockSpec((1, E), lambda i: (0, 0))],
        out_specs=pl.BlockSpec((1, S0 + 1, E), lambda i: (i, 0, 0)),
        out_shape=jax.ShapeDtypeStruct((B, S0 + 1, E), patches.dtype),
        compiler_params=pltpu.CompilerParams(dimension_semantics=("parallel",)),
    )(patches, w, b, pe, cls)


# ---------------------------------------------------------------------------
# Kernel 2: all transformer encoder blocks + MLP head, fully fused
# ---------------------------------------------------------------------------

def _vit_encoder_kernel(x_ref,
                        ln1_g_ref, ln1_b_ref, in_w_ref, in_b_ref,
                        out_w_ref, out_b_ref,
                        ln2_g_ref, ln2_b_ref, ff1_w_ref, ff1_b_ref,
                        ff2_w_ref, ff2_b_ref,
                        hg_ref, hb_ref, hw_ref, hbias_ref,
                        o_ref, acc_ref,
                        *, n_heads, eps, sigmoid, average_cls):
    """Grid = (batch, layer).  acc_ref holds the (S, E) activation in VMEM
    across the layer axis; weights for layer l are selected by BlockSpec."""
    l = pl.program_id(1)
    n_layers = pl.num_programs(1)

    @pl.when(l == 0)
    def _():
        acc_ref[...] = x_ref[0].astype(jnp.float32)

    x = acc_ref[...]                                             # (S, E) f32
    S, E = x.shape
    Dh = E // n_heads
    scale = 1.0 / (Dh ** 0.5)

    # ---- multi-head self attention (pre-norm) -----------------------------
    h = _layernorm(x, ln1_g_ref[0], ln1_b_ref[0], eps)
    qkv = (jnp.dot(h.astype(jnp.bfloat16), in_w_ref[0],          # bf16 weights
                   preferred_element_type=jnp.float32)
           + in_b_ref[0])                                        # (S, 3E) f32

    heads = []
    for hh in range(n_heads):
        q = qkv[:, hh * Dh:(hh + 1) * Dh] * scale                # (S, Dh)
        k = qkv[:, E + hh * Dh:E + (hh + 1) * Dh]
        v = qkv[:, 2 * E + hh * Dh:2 * E + (hh + 1) * Dh]
        # q @ k^T without explicit transpose (contract last dims).
        s = jax.lax.dot_general(q.astype(jnp.bfloat16), k.astype(jnp.bfloat16),
                                (((1,), (1,)), ((), ())),
                                preferred_element_type=jnp.float32)   # (S, S)
        s = s - jnp.max(s, axis=-1, keepdims=True)
        p = jnp.exp(s)
        p = p * pl.reciprocal(jnp.sum(p, axis=-1, keepdims=True), approx=True)
        heads.append(jnp.dot(p.astype(jnp.bfloat16), v.astype(jnp.bfloat16),
                             preferred_element_type=jnp.float32))     # (S, Dh)
    attn = jnp.concatenate(heads, axis=-1)                       # (S, E)
    # Single out-projection with K=E (instead of n_heads K=Dh matmuls).
    x = x + (jnp.dot(attn.astype(jnp.bfloat16), out_w_ref[0],
                     preferred_element_type=jnp.float32) + out_b_ref[0])

    # ---- feed forward (pre-norm, ReLU) -------------------------------------
    h2 = _layernorm(x, ln2_g_ref[0], ln2_b_ref[0], eps)
    ff = jnp.maximum(jnp.dot(h2.astype(jnp.bfloat16), ff1_w_ref[0],
                             preferred_element_type=jnp.float32)
                     + ff1_b_ref[0], 0.0)
    x = x + (jnp.dot(ff.astype(jnp.bfloat16), ff2_w_ref[0],
                     preferred_element_type=jnp.float32) + ff2_b_ref[0])

    acc_ref[...] = x                                             # stays in VMEM

    # ---- fused MLP head on the final layer ---------------------------------
    @pl.when(l == n_layers - 1)
    def _():
        if average_cls:
            cls = jnp.mean(x, axis=0, keepdims=True)             # (1, E)
        else:
            cls = x[0:1, :]                                      # CLS row
        hc = _layernorm(cls, hg_ref[...], hb_ref[...], eps)
        y = (jnp.dot(hc.astype(jnp.bfloat16), hw_ref[...],
                     preferred_element_type=jnp.float32) + hbias_ref[...])
        if sigmoid:
            y = jax.nn.sigmoid(y)
        o_ref[0] = y.astype(o_ref.dtype)


def vit_encoder_and_head(x, params, cfg, average_cls_token=False, eps=1e-5):
    """x: (B, S, E) -> (B, out_dim).  One fused pallas_call for all blocks."""
    B, S, E = x.shape
    L = cfg["num_blocks"]
    Hd = cfg["hidden_dim"]
    nO = cfg["out_dim"]
    kern = functools.partial(_vit_encoder_kernel,
                             n_heads=cfg["n_attn_heads"], eps=eps,
                             sigmoid=cfg["sigmoid_output"],
                             average_cls=average_cls_token)
    wsp = lambda shape: pl.BlockSpec(shape, lambda b, l: (l, 0, 0))   # per-layer
    hsp = lambda shape: pl.BlockSpec(shape, lambda b, l: (0, 0))      # head weights

    out = pl.pallas_call(
        kern,
        grid=(B, L),
        in_specs=[pl.BlockSpec((1, S, E), lambda b, l: (b, 0, 0)),    # activation in
                  wsp((1, 1, E)), wsp((1, 1, E)),                     # ln1
                  wsp((1, E, 3 * E)), wsp((1, 1, 3 * E)),             # qkv proj
                  wsp((1, E, E)), wsp((1, 1, E)),                     # out proj
                  wsp((1, 1, E)), wsp((1, 1, E)),                     # ln2
                  wsp((1, E, Hd)), wsp((1, 1, Hd)),                   # ff1
                  wsp((1, Hd, E)), wsp((1, 1, E)),                    # ff2
                  hsp((1, E)), hsp((1, E)),                           # head LN
                  hsp((E, nO)), hsp((1, nO))],                        # head linear
        out_specs=pl.BlockSpec((1, 1, nO), lambda b, l: (b, 0, 0)),
        out_shape=jax.ShapeDtypeStruct((B, 1, nO), x.dtype),
        scratch_shapes=[pltpu.VMEM((S, E), jnp.float32)],             # resident act.
        compiler_params=pltpu.CompilerParams(
            dimension_semantics=("parallel", "arbitrary")),
    )(x,
      params["blk_ln1_g"], params["blk_ln1_b"],
      params["blk_in_w"], params["blk_in_b"],
      params["blk_out_w"], params["blk_out_b"],
      params["blk_ln2_g"], params["blk_ln2_b"],
      params["blk_ff1_w"], params["blk_ff1_b"],
      params["blk_ff2_w"], params["blk_ff2_b"],
      params["head_ln_g"], params["head_ln_b"],
      params["head_w"], params["head_b"])
    return out.reshape(B, nO)


# ---------------------------------------------------------------------------
# Parameter initialization (deterministic, synthetic); weights pre-cast bf16
# ---------------------------------------------------------------------------

def init_vit_params(key, cfg):
    E, Hd, L = cfg["embed_dim"], cfg["hidden_dim"], cfg["num_blocks"]
    n_h = cfg["img_height"] // cfg["patch_height"]
    n_w = cfg["img_width"] // cfg["patch_width"]
    P = cfg["img_channels"] * cfg["patch_height"] * cfg["patch_width"]
    nO = cfg["out_dim"]

    keys = iter(jax.random.split(key, 32))
    nrm = lambda shape, s=1.0: (jax.random.normal(next(keys), shape) * s).astype(jnp.float32)
    bf = lambda a: a.astype(jnp.bfloat16)      # matmul weights: bf16 host-side

    return {
        "img_pe_col": nrm((n_h, 1, E)),
        "img_pe_row": nrm((n_w, 1, E)),
        "cls_token": nrm((1, 1, E)),
        "patch_w": bf(nrm((P, E), 0.02)),
        "patch_b": jnp.zeros((1, E), jnp.float32),
        "head_ln_g": jnp.ones((1, E), jnp.float32),
        "head_ln_b": jnp.zeros((1, E), jnp.float32),
        "head_w": bf(nrm((E, nO), 0.02)),
        "head_b": jnp.zeros((1, nO), jnp.float32),
        # Per-layer weights stacked on a leading L axis (combined QKV proj).
        "blk_ln1_g": jnp.ones((L, 1, E), jnp.float32),
        "blk_ln1_b": jnp.zeros((L, 1, E), jnp.float32),
        "blk_in_w": bf(nrm((L, E, 3 * E), 0.02)),
        "blk_in_b": jnp.zeros((L, 1, 3 * E), jnp.float32),
        "blk_out_w": bf(nrm((L, E, E), 0.02)),
        "blk_out_b": jnp.zeros((L, 1, E), jnp.float32),
        "blk_ln2_g": jnp.ones((L, 1, E), jnp.float32),
        "blk_ln2_b": jnp.zeros((L, 1, E), jnp.float32),
        "blk_ff1_w": bf(nrm((L, E, Hd), 0.02)),
        "blk_ff1_b": jnp.zeros((L, 1, Hd), jnp.float32),
        "blk_ff2_w": bf(nrm((L, Hd, E), 0.02)),
        "blk_ff2_b": jnp.zeros((L, 1, E), jnp.float32),
    }


# ---------------------------------------------------------------------------
# Forward pass (2 pallas_calls total)
# ---------------------------------------------------------------------------

def vit_forward(x, params, cfg, average_cls_token=False):
    B, C, H, W = x.shape
    ph, pw = cfg["patch_height"], cfg["patch_width"]
    n_h, n_w = H // ph, W // pw
    E = cfg["embed_dim"]
    S0 = n_h * n_w

    # Rearrange 'b c (h p1) (w p2) -> b (h w) (p1 p2 c)'  (host-side layout glue)
    xr = x.reshape(B, C, n_h, ph, n_w, pw).transpose(0, 2, 4, 3, 5, 1)
    patches = xr.reshape(B, S0, ph * pw * C)

    # Positional embedding per sequence position, matching the reference's
    # repeat / repeat_interleave semantics exactly:
    #   pe[s] = img_pe_col[s % n_h] + img_pe_row[s // n_h]
    pe = (jnp.tile(params["img_pe_col"][:, 0, :], (n_w, 1))
          + jnp.repeat(params["img_pe_row"][:, 0, :], n_h, axis=0))

    # Kernel 1: patch embedding + PE add + CLS prepend -> (B, S0+1, E).
    full_x = patch_embed_cls(patches, params["patch_w"], params["patch_b"],
                             pe, params["cls_token"].reshape(1, E))

    # Kernel 2: all encoder blocks + MLP head, activation resident in VMEM.
    out = vit_encoder_and_head(full_x, params, cfg, average_cls_token)

    # Matches torch .squeeze() semantics of the reference (also squeezes B=1).
    return jnp.squeeze(out)


# ---------------------------------------------------------------------------
# Main
# ---------------------------------------------------------------------------

if __name__ == "__main__":
    cfg = dict(
        img_height=16, img_width=16, img_channels=4,
        patch_height=4, patch_width=4,
        embed_dim=32, num_blocks=2, hidden_dim=64,
        n_attn_heads=4, dropout_prob=0.0, out_dim=8,
        sigmoid_output=False,
    )

    key = jax.random.PRNGKey(0)
    pkey, xkey = jax.random.split(key)
    params = init_vit_params(pkey, cfg)
    x = jax.random.normal(xkey, (2, cfg["img_channels"],
                                 cfg["img_height"], cfg["img_width"]),
                          dtype=jnp.float32)

    fwd = jax.jit(functools.partial(vit_forward, cfg=cfg))
    out = fwd(x, params)
    jax.block_until_ready(out)
    assert out.shape == (2, cfg["out_dim"])
    print("KERNEL_OK")
</pallas_src>

<mosaic_0001>
module attributes {stable_mosaic.version = 11 : i64} {
  func.func @_embed_kernel(%arg0: i32, %arg1: memref<1x16x64xf32, #tpu.memory_space<vmem>>, %arg2: memref<64x32xbf16, #tpu.memory_space<vmem>>, %arg3: memref<1x32xf32, #tpu.memory_space<vmem>>, %arg4: memref<16x32xf32, #tpu.memory_space<vmem>>, %arg5: memref<1x32xf32, #tpu.memory_space<vmem>>, %arg6: memref<1x17x32xf32, #tpu.memory_space<vmem>>) attributes {dimension_semantics = [#tpu.dimension_semantics<parallel>], iteration_bounds = array<i64: 2>, scalar_prefetch = 0 : i64, scratch_operands = 0 : i64, tpu.core_type = #tpu.core_type<tc>, window_params = [{transform_indices = @transform_0, window_bounds = array<i64: 1, 16, 64>}, {pipeline_mode = #tpu.pipeline_mode<synchronous>, transform_indices = @transform_1, window_bounds = array<i64: 64, 32>}, {pipeline_mode = #tpu.pipeline_mode<synchronous>, transform_indices = @transform_2, window_bounds = array<i64: 1, 32>}, {pipeline_mode = #tpu.pipeline_mode<synchronous>, transform_indices = @transform_3, window_bounds = array<i64: 16, 32>}, {pipeline_mode = #tpu.pipeline_mode<synchronous>, transform_indices = @transform_4, window_bounds = array<i64: 1, 32>}, {transform_indices = @transform_5, window_bounds = array<i64: 1, 17, 32>}]} {
    %c0 = arith.constant 0 : index
    %c0_0 = arith.constant 0 : index
    %c0_1 = arith.constant 0 : index
    %0 = vector.load %arg1[%c0, %c0_0, %c0_1] : memref<1x16x64xf32, #tpu.memory_space<vmem>>, vector<1x16x64xf32>
    %1 = vector.shape_cast %0 : vector<1x16x64xf32> to vector<16x64xf32>
    %2 = arith.truncf %1 : vector<16x64xf32> to vector<16x64xbf16>
    %c0_2 = arith.constant 0 : index
    %c0_3 = arith.constant 0 : index
    %3 = vector.load %arg2[%c0_2, %c0_3] : memref<64x32xbf16, #tpu.memory_space<vmem>>, vector<64x32xbf16>
    %cst = arith.constant dense<0.000000e+00> : vector<16x32xf32>
    %4 = tpu.matmul %2, %3, %cst {dimension_numbers = #tpu.dot_dimension_numbers<[1], [0], [0], [1], [0, 0, 1, 1], [], []>} : vector<16x64xbf16>, vector<64x32xbf16>, vector<16x32xf32> -> vector<16x32xf32>
    %c0_4 = arith.constant 0 : index
    %c0_5 = arith.constant 0 : index
    %5 = vector.load %arg3[%c0_4, %c0_5] : memref<1x32xf32, #tpu.memory_space<vmem>>, vector<1x32xf32>
    %6 = vector.broadcast %5 : vector<1x32xf32> to vector<16x32xf32>
    %7 = arith.addf %4, %6 : vector<16x32xf32>
    %c0_6 = arith.constant 0 : index
    %c0_7 = arith.constant 0 : index
    %8 = vector.load %arg4[%c0_6, %c0_7] : memref<16x32xf32, #tpu.memory_space<vmem>>, vector<16x32xf32>
    %9 = arith.addf %7, %8 : vector<16x32xf32>
    %c0_8 = arith.constant 0 : index
    %c0_9 = arith.constant 0 : index
    %10 = vector.load %arg5[%c0_8, %c0_9] : memref<1x32xf32, #tpu.memory_space<vmem>>, vector<1x32xf32>
    %11 = tpu.concatenate %10, %9 in 0 : vector<1x32xf32>, vector<16x32xf32> -> vector<17x32xf32>
    %c0_10 = arith.constant 0 : index
    %c0_11 = arith.constant 0 : index
    %c0_12 = arith.constant 0 : index
    %12 = vector.load %arg6[%c0_10, %c0_11, %c0_12] : memref<1x17x32xf32, #tpu.memory_space<vmem>>, vector<1x17x32xf32>
    %13 = vector.shape_cast %12 : vector<1x17x32xf32> to vector<17x32xf32>
    %14 = vector.shape_cast %11 : vector<17x32xf32> to vector<1x17x32xf32>
    tpu.vector_store %arg6[%c0_10, %c0_11, %c0_12], %14 {strides = array<i32>} : memref<1x17x32xf32, #tpu.memory_space<vmem>>, vector<1x17x32xf32>,
    return
  }
  func.func @transform_0(%arg0: i32) -> (i32, i32, i32) {
    %c0_i32 = arith.constant 0 : i32
    %c0_i32_0 = arith.constant 0 : i32
    %c0_i32_1 = arith.constant 0 : i32
    return %arg0, %c0_i32, %c0_i32_0 : i32, i32, i32
  }
  func.func @transform_1(%arg0: i32) -> (i32, i32) {
    %c0_i32 = arith.constant 0 : i32
    %c0_i32_0 = arith.constant 0 : i32
    %c0_i32_1 = arith.constant 0 : i32
    return %c0_i32, %c0_i32_0 : i32, i32
  }
  func.func @transform_2(%arg0: i32) -> (i32, i32) {
    %c0_i32 = arith.constant 0 : i32
    %c0_i32_0 = arith.constant 0 : i32
    %c0_i32_1 = arith.constant 0 : i32
    return %c0_i32, %c0_i32_0 : i32, i32
  }
  func.func @transform_3(%arg0: i32) -> (i32, i32) {
    %c0_i32 = arith.constant 0 : i32
    %c0_i32_0 = arith.constant 0 : i32
    %c0_i32_1 = arith.constant 0 : i32
    return %c0_i32, %c0_i32_0 : i32, i32
  }
  func.func @transform_4(%arg0: i32) -> (i32, i32) {
    %c0_i32 = arith.constant 0 : i32
    %c0_i32_0 = arith.constant 0 : i32
    %c0_i32_1 = arith.constant 0 : i32
    return %c0_i32, %c0_i32_0 : i32, i32
  }
  func.func @transform_5(%arg0: i32) -> (i32, i32, i32) {
    %c0_i32 = arith.constant 0 : i32
    %c0_i32_0 = arith.constant 0 : i32
    %c0_i32_1 = arith.constant 0 : i32
    return %arg0, %c0_i32, %c0_i32_0 : i32, i32, i32
  }
}

module attributes {stable_mosaic.version = 11 : i64} {
  func.func @_vit_encoder_kernel(%arg0: i32, %arg1: i32, %arg2: memref<1x17x32xf32, #tpu.memory_space<vmem>>, %arg3: memref<1x1x32xf32, #tpu.memory_space<vmem>>, %arg4: memref<1x1x32xf32, #tpu.memory_space<vmem>>, %arg5: memref<1x32x96xbf16, #tpu.memory_space<vmem>>, %arg6: memref<1x1x96xf32, #tpu.memory_space<vmem>>, %arg7: memref<1x32x32xbf16, #tpu.memory_space<vmem>>, %arg8: memref<1x1x32xf32, #tpu.memory_space<vmem>>, %arg9: memref<1x1x32xf32, #tpu.memory_space<vmem>>, %arg10: memref<1x1x32xf32, #tpu.memory_space<vmem>>, %arg11: memref<1x32x64xbf16, #tpu.memory_space<vmem>>, %arg12: memref<1x1x64xf32, #tpu.memory_space<vmem>>, %arg13: memref<1x64x32xbf16, #tpu.memory_space<vmem>>, %arg14: memref<1x1x32xf32, #tpu.memory_space<vmem>>, %arg15: memref<1x32xf32, #tpu.memory_space<vmem>>, %arg16: memref<1x32xf32, #tpu.memory_space<vmem>>, %arg17: memref<32x8xbf16, #tpu.memory_space<vmem>>, %arg18: memref<1x8xf32, #tpu.memory_space<vmem>>, %arg19: memref<1x1x8xf32, #tpu.memory_space<vmem>>, %arg20: memref<17x32xf32, #tpu.memory_space<vmem>>) attributes {dimension_semantics = [#tpu.dimension_semantics<parallel>, #tpu.dimension_semantics<arbitrary>], iteration_bounds = array<i64: 2, 2>, scalar_prefetch = 0 : i64, scratch_operands = 1 : i64, tpu.core_type = #tpu.core_type<tc>, window_params = [{transform_indices = @transform_0, window_bounds = array<i64: 1, 17, 32>}, {transform_indices = @transform_1, window_bounds = array<i64: 1, 1, 32>}, {transform_indices = @transform_2, window_bounds = array<i64: 1, 1, 32>}, {transform_indices = @transform_3, window_bounds = array<i64: 1, 32, 96>}, {transform_indices = @transform_4, window_bounds = array<i64: 1, 1, 96>}, {transform_indices = @transform_5, window_bounds = array<i64: 1, 32, 32>}, {transform_indices = @transform_6, window_bounds = array<i64: 1, 1, 32>}, {transform_indices = @transform_7, window_bounds = array<i64: 1, 1, 32>}, {transform_indices = @transform_8, window_bounds = array<i64: 1, 1, 32>}, {transform_indices = @transform_9, window_bounds = array<i64: 1, 32, 64>}, {transform_indices = @transform_10, window_bounds = array<i64: 1, 1, 64>}, {transform_indices = @transform_11, window_bounds = array<i64: 1, 64, 32>}, {transform_indices = @transform_12, window_bounds = array<i64: 1, 1, 32>}, {pipeline_mode = #tpu.pipeline_mode<synchronous>, transform_indices = @transform_13, window_bounds = array<i64: 1, 32>}, {pipeline_mode = #tpu.pipeline_mode<synchronous>, transform_indices = @transform_14, window_bounds = array<i64: 1, 32>}, {pipeline_mode = #tpu.pipeline_mode<synchronous>, transform_indices = @transform_15, window_bounds = array<i64: 32, 8>}, {pipeline_mode = #tpu.pipeline_mode<synchronous>, transform_indices = @transform_16, window_bounds = array<i64: 1, 8>}, {transform_indices = @transform_17, window_bounds = array<i64: 1, 1, 8>}]} {
    %c0_i32 = arith.constant 0 : i32
    %0 = arith.cmpi eq, %arg1, %c0_i32 : i32
    %1 = arith.extui %0 : i1 to i32
    %c0_i32_0 = arith.constant 0 : i32
    %2 = arith.cmpi ne, %1, %c0_i32_0 : i32
    scf.if %2 {
      %c0_75 = arith.constant 0 : index
      %c0_76 = arith.constant 0 : index
      %c0_77 = arith.constant 0 : index
      %181 = vector.load %arg2[%c0_75, %c0_76, %c0_77] : memref<1x17x32xf32, #tpu.memory_space<vmem>>, vector<1x17x32xf32>
      %182 = vector.shape_cast %181 : vector<1x17x32xf32> to vector<17x32xf32>
      %c0_78 = arith.constant 0 : index
      %c0_79 = arith.constant 0 : index
      %183 = vector.load %arg20[%c0_78, %c0_79] : memref<17x32xf32, #tpu.memory_space<vmem>>, vector<17x32xf32>
      tpu.vector_store %arg20[%c0_78, %c0_79], %182 {strides = array<i32>} : memref<17x32xf32, #tpu.memory_space<vmem>>, vector<17x32xf32>,
    } else {
    }
    %c0 = arith.constant 0 : index
    %c0_1 = arith.constant 0 : index
    %3 = vector.load %arg20[%c0, %c0_1] : memref<17x32xf32, #tpu.memory_space<vmem>>, vector<17x32xf32>
    %c0_2 = arith.constant 0 : index
    %c0_3 = arith.constant 0 : index
    %c0_4 = arith.constant 0 : index
    %4 = vector.load %arg3[%c0_2, %c0_3, %c0_4] : memref<1x1x32xf32, #tpu.memory_space<vmem>>, vector<1x1x32xf32>
    %5 = vector.shape_cast %4 : vector<1x1x32xf32> to vector<1x32xf32>
    %c0_5 = arith.constant 0 : index
    %c0_6 = arith.constant 0 : index
    %c0_7 = arith.constant 0 : index
    %6 = vector.load %arg4[%c0_5, %c0_6, %c0_7] : memref<1x1x32xf32, #tpu.memory_space<vmem>>, vector<1x1x32xf32>
    %7 = vector.shape_cast %6 : vector<1x1x32xf32> to vector<1x32xf32>
    %cst = arith.constant dense<0.000000e+00> : vector<17xf32>
    %8 = vector.multi_reduction <add>, %3, %cst [1] : vector<17x32xf32> to vector<17xf32>
    %9 = vector.shape_cast %8 : vector<17xf32> to vector<17x1xf32>
    %cst_8 = arith.constant 3.200000e+01 : f32
    %10 = vector.broadcast %cst_8 : f32 to vector<17x1xf32>
    %11 = arith.divf %9, %10 : vector<17x1xf32>
    %12 = vector.broadcast %11 : vector<17x1xf32> to vector<17x32xf32>
    %13 = arith.subf %3, %12 : vector<17x32xf32>
    %14 = arith.mulf %13, %13 : vector<17x32xf32>
    %cst_9 = arith.constant dense<0.000000e+00> : vector<17xf32>
    %15 = vector.multi_reduction <add>, %14, %cst_9 [1] : vector<17x32xf32> to vector<17xf32>
    %16 = vector.shape_cast %15 : vector<17xf32> to vector<17x1xf32>
    %cst_10 = arith.constant 3.200000e+01 : f32
    %17 = vector.broadcast %cst_10 : f32 to vector<17x1xf32>
    %18 = arith.divf %16, %17 : vector<17x1xf32>
    %19 = vector.broadcast %11 : vector<17x1xf32> to vector<17x32xf32>
    %20 = arith.subf %3, %19 : vector<17x32xf32>
    %cst_11 = arith.constant 9.99999974E-6 : f32
    %21 = vector.broadcast %cst_11 : f32 to vector<17x1xf32>
    %22 = arith.addf %18, %21 : vector<17x1xf32>
    %23 = math.rsqrt %22 : vector<17x1xf32>
    %24 = vector.broadcast %23 : vector<17x1xf32> to vector<17x32xf32>
    %25 = arith.mulf %20, %24 : vector<17x32xf32>
    %26 = vector.broadcast %5 : vector<1x32xf32> to vector<17x32xf32>
    %27 = arith.mulf %25, %26 : vector<17x32xf32>
    %28 = vector.broadcast %7 : vector<1x32xf32> to vector<17x32xf32>
    %29 = arith.addf %27, %28 : vector<17x32xf32>
    %30 = arith.truncf %29 : vector<17x32xf32> to vector<17x32xbf16>
    %c0_12 = arith.constant 0 : index
    %c0_13 = arith.constant 0 : index
    %c0_14 = arith.constant 0 : index
    %31 = vector.load %arg5[%c0_12, %c0_13, %c0_14] : memref<1x32x96xbf16, #tpu.memory_space<vmem>>, vector<1x32x96xbf16>
    %32 = vector.shape_cast %31 : vector<1x32x96xbf16> to vector<32x96xbf16>
    %cst_15 = arith.constant dense<0.000000e+00> : vector<17x96xf32>
    %33 = tpu.matmul %30, %32, %cst_15 {dimension_numbers = #tpu.dot_dimension_numbers<[1], [0], [0], [1], [0, 0, 1, 1], [], []>} : vector<17x32xbf16>, vector<32x96xbf16>, vector<17x96xf32> -> vector<17x96xf32>
    %c0_16 = arith.constant 0 : index
    %c0_17 = arith.constant 0 : index
    %c0_18 = arith.constant 0 : index
    %34 = vector.load %arg6[%c0_16, %c0_17, %c0_18] : memref<1x1x96xf32, #tpu.memory_space<vmem>>, vector<1x1x96xf32>
    %35 = vector.shape_cast %34 : vector<1x1x96xf32> to vector<1x96xf32>
    %36 = vector.broadcast %35 : vector<1x96xf32> to vector<17x96xf32>
    %37 = arith.addf %33, %36 : vector<17x96xf32>
    %38 = vector.extract_strided_slice %37 {offsets = [0, 0], sizes = [17, 8], strides = [1, 1]} : vector<17x96xf32> to vector<17x8xf32>
    %cst_19 = arith.constant 0.353553385 : f32
    %39 = vector.broadcast %cst_19 : f32 to vector<17x8xf32>
    %40 = arith.mulf %38, %39 : vector<17x8xf32>
    %41 = vector.extract_strided_slice %37 {offsets = [0, 32], sizes = [17, 8], strides = [1, 1]} : vector<17x96xf32> to vector<17x8xf32>
    %42 = vector.extract_strided_slice %37 {offsets = [0, 64], sizes = [17, 8], strides = [1, 1]} : vector<17x96xf32> to vector<17x8xf32>
    %43 = arith.truncf %40 : vector<17x8xf32> to vector<17x8xbf16>
    %44 = arith.truncf %41 : vector<17x8xf32> to vector<17x8xbf16>
    %cst_20 = arith.constant dense<0.000000e+00> : vector<17x17xf32>
    %45 = tpu.matmul %43, %44, %cst_20 {dimension_numbers = #tpu.dot_dimension_numbers<[1], [1], [0], [0], [0, 0, 1, 0], [], []>} : vector<17x8xbf16>, vector<17x8xbf16>, vector<17x17xf32> -> vector<17x17xf32>
    %cst_21 = arith.constant dense<0xFF800000> : vector<17xf32>
    %46 = vector.multi_reduction <maximumf>, %45, %cst_21 [1] : vector<17x17xf32> to vector<17xf32>
    %47 = vector.shape_cast %46 : vector<17xf32> to vector<17x1xf32>
    %48 = vector.broadcast %47 : vector<17x1xf32> to vector<17x17xf32>
    %49 = arith.subf %45, %48 : vector<17x17xf32>
    %50 = math.exp %49 : vector<17x17xf32>
    %cst_22 = arith.constant dense<0.000000e+00> : vector<17xf32>
    %51 = vector.multi_reduction <add>, %50, %cst_22 [1] : vector<17x17xf32> to vector<17xf32>
    %52 = vector.shape_cast %51 : vector<17xf32> to vector<17x1xf32>
    %53 = tpu.reciprocal %52 {approx = true} : vector<17x1xf32> -> vector<17x1xf32>
    %54 = vector.broadcast %53 : vector<17x1xf32> to vector<17x17xf32>
    %55 = arith.mulf %50, %54 : vector<17x17xf32>
    %56 = arith.truncf %55 : vector<17x17xf32> to vector<17x17xbf16>
    %57 = arith.truncf %42 : vector<17x8xf32> to vector<17x8xbf16>
    %cst_23 = arith.constant dense<0.000000e+00> : vector<17x8xf32>
    %58 = tpu.matmul %56, %57, %cst_23 {dimension_numbers = #tpu.dot_dimension_numbers<[1], [0], [0], [1], [0, 0, 1, 1], [], []>} : vector<17x17xbf16>, vector<17x8xbf16>, vector<17x8xf32> -> vector<17x8xf32>
    %59 = vector.extract_strided_slice %37 {offsets = [0, 8], sizes = [17, 8], strides = [1, 1]} : vector<17x96xf32> to vector<17x8xf32>
    %cst_24 = arith.constant 0.353553385 : f32
    %60 = vector.broadcast %cst_24 : f32 to vector<17x8xf32>
    %61 = arith.mulf %59, %60 : vector<17x8xf32>
    %62 = vector.extract_strided_slice %37 {offsets = [0, 40], sizes = [17, 8], strides = [1, 1]} : vector<17x96xf32> to vector<17x8xf32>
    %63 = vector.extract_strided_slice %37 {offsets = [0, 72], sizes = [17, 8], strides = [1, 1]} : vector<17x96xf32> to vector<17x8xf32>
    %64 = arith.truncf %61 : vector<17x8xf32> to vector<17x8xbf16>
    %65 = arith.truncf %62 : vector<17x8xf32> to vector<17x8xbf16>
    %cst_25 = arith.constant dense<0.000000e+00> : vector<17x17xf32>
    %66 = tpu.matmul %64, %65, %cst_25 {dimension_numbers = #tpu.dot_dimension_numbers<[1], [1], [0], [0], [0, 0, 1, 0], [], []>} : vector<17x8xbf16>, vector<17x8xbf16>, vector<17x17xf32> -> vector<17x17xf32>
    %cst_26 = arith.constant dense<0xFF800000> : vector<17xf32>
    %67 = vector.multi_reduction <maximumf>, %66, %cst_26 [1] : vector<17x17xf32> to vector<17xf32>
    %68 = vector.shape_cast %67 : vector<17xf32> to vector<17x1xf32>
    %69 = vector.broadcast %68 : vector<17x1xf32> to vector<17x17xf32>
    %70 = arith.subf %66, %69 : vector<17x17xf32>
    %71 = math.exp %70 : vector<17x17xf32>
    %cst_27 = arith.constant dense<0.000000e+00> : vector<17xf32>
    %72 = vector.multi_reduction <add>, %71, %cst_27 [1] : vector<17x17xf32> to vector<17xf32>
    %73 = vector.shape_cast %72 : vector<17xf32> to vector<17x1xf32>
    %74 = tpu.reciprocal %73 {approx = true} : vector<17x1xf32> -> vector<17x1xf32>
    %75 = vector.broadcast %74 : vector<17x1xf32> to vector<17x17xf32>
    %76 = arith.mulf %71, %75 : vector<17x17xf32>
    %77 = arith.truncf %76 : vector<17x17xf32> to vector<17x17xbf16>
    %78 = arith.truncf %63 : vector<17x8xf32> to vector<17x8xbf16>
    %cst_28 = arith.constant dense<0.000000e+00> : vector<17x8xf32>
    %79 = tpu.matmul %77, %78, %cst_28 {dimension_numbers = #tpu.dot_dimension_numbers<[1], [0], [0], [1], [0, 0, 1, 1], [], []>} : vector<17x17xbf16>, vector<17x8xbf16>, vector<17x8xf32> -> vector<17x8xf32>
    %80 = vector.extract_strided_slice %37 {offsets = [0, 16], sizes = [17, 8], strides = [1, 1]} : vector<17x96xf32> to vector<17x8xf32>
    %cst_29 = arith.constant 0.353553385 : f32
    %81 = vector.broadcast %cst_29 : f32 to vector<17x8xf32>
    %82 = arith.mulf %80, %81 : vector<17x8xf32>
    %83 = vector.extract_strided_slice %37 {offsets = [0, 48], sizes = [17, 8], strides = [1, 1]} : vector<17x96xf32> to vector<17x8xf32>
    %84 = vector.extract_strided_slice %37 {offsets = [0, 80], sizes = [17, 8], strides = [1, 1]} : vector<17x96xf32> to vector<17x8xf32>
    %85 = arith.truncf %82 : vector<17x8xf32> to vector<17x8xbf16>
    %86 = arith.truncf %83 : vector<17x8xf32> to vector<17x8xbf16>
    %cst_30 = arith.constant dense<0.000000e+00> : vector<17x17xf32>
    %87 = tpu.matmul %85, %86, %cst_30 {dimension_numbers = #tpu.dot_dimension_numbers<[1], [1], [0], [0], [0, 0, 1, 0], [], []>} : vector<17x8xbf16>, vector<17x8xbf16>, vector<17x17xf32> -> vector<17x17xf32>
    %cst_31 = arith.constant dense<0xFF800000> : vector<17xf32>
    %88 = vector.multi_reduction <maximumf>, %87, %cst_31 [1] : vector<17x17xf32> to vector<17xf32>
    %89 = vector.shape_cast %88 : vector<17xf32> to vector<17x1xf32>
    %90 = vector.broadcast %89 : vector<17x1xf32> to vector<17x17xf32>
    %91 = arith.subf %87, %90 : vector<17x17xf32>
    %92 = math.exp %91 : vector<17x17xf32>
    %cst_32 = arith.constant dense<0.000000e+00> : vector<17xf32>
    %93 = vector.multi_reduction <add>, %92, %cst_32 [1] : vector<17x17xf32> to vector<17xf32>
    %94 = vector.shape_cast %93 : vector<17xf32> to vector<17x1xf32>
    %95 = tpu.reciprocal %94 {approx = true} : vector<17x1xf32> -> vector<17x1xf32>
    %96 = vector.broadcast %95 : vector<17x1xf32> to vector<17x17xf32>
    %97 = arith.mulf %92, %96 : vector<17x17xf32>
    %98 = arith.truncf %97 : vector<17x17xf32> to vector<17x17xbf16>
    %99 = arith.truncf %84 : vector<17x8xf32> to vector<17x8xbf16>
    %cst_33 = arith.constant dense<0.000000e+00> : vector<17x8xf32>
    %100 = tpu.matmul %98, %99, %cst_33 {dimension_numbers = #tpu.dot_dimension_numbers<[1], [0], [0], [1], [0, 0, 1, 1], [], []>} : vector<17x17xbf16>, vector<17x8xbf16>, vector<17x8xf32> -> vector<17x8xf32>
    %101 = vector.extract_strided_slice %37 {offsets = [0, 24], sizes = [17, 8], strides = [1, 1]} : vector<17x96xf32> to vector<17x8xf32>
    %cst_34 = arith.constant 0.353553385 : f32
    %102 = vector.broadcast %cst_34 : f32 to vector<17x8xf32>
    %103 = arith.mulf %101, %102 : vector<17x8xf32>
    %104 = vector.extract_strided_slice %37 {offsets = [0, 56], sizes = [17, 8], strides = [1, 1]} : vector<17x96xf32> to vector<17x8xf32>
    %105 = vector.extract_strided_slice %37 {offsets = [0, 88], sizes = [17, 8], strides = [1, 1]} : vector<17x96xf32> to vector<17x8xf32>
    %106 = arith.truncf %103 : vector<17x8xf32> to vector<17x8xbf16>
    %107 = arith.truncf %104 : vector<17x8xf32> to vector<17x8xbf16>
    %cst_35 = arith.constant dense<0.000000e+00> : vector<17x17xf32>
    %108 = tpu.matmul %106, %107, %cst_35 {dimension_numbers = #tpu.dot_dimension_numbers<[1], [1], [0], [0], [0, 0, 1, 0], [], []>} : vector<17x8xbf16>, vector<17x8xbf16>, vector<17x17xf32> -> vector<17x17xf32>
    %cst_36 = arith.constant dense<0xFF800000> : vector<17xf32>
    %109 = vector.multi_reduction <maximumf>, %108, %cst_36 [1] : vector<17x17xf32> to vector<17xf32>
    %110 = vector.shape_cast %109 : vector<17xf32> to vector<17x1xf32>
    %111 = vector.broadcast %110 : vector<17x1xf32> to vector<17x17xf32>
    %112 = arith.subf %108, %111 : vector<17x17xf32>
    %113 = math.exp %112 : vector<17x17xf32>
    %cst_37 = arith.constant dense<0.000000e+00> : vector<17xf32>
    %114 = vector.multi_reduction <add>, %113, %cst_37 [1] : vector<17x17xf32> to vector<17xf32>
    %115 = vector.shape_cast %114 : vector<17xf32> to vector<17x1xf32>
    %116 = tpu.reciprocal %115 {approx = true} : vector<17x1xf32> -> vector<17x1xf32>
    %117 = vector.broadcast %116 : vector<17x1xf32> to vector<17x17xf32>
    %118 = arith.mulf %113, %117 : vector<17x17xf32>
    %119 = arith.truncf %118 : vector<17x17xf32> to vector<17x17xbf16>
    %120 = arith.truncf %105 : vector<17x8xf32> to vector<17x8xbf16>
    %cst_38 = arith.constant dense<0.000000e+00> : vector<17x8xf32>
    %121 = tpu.matmul %119, %120, %cst_38 {dimension_numbers = #tpu.dot_dimension_numbers<[1], [0], [0], [1], [0, 0, 1, 1], [], []>} : vector<17x17xbf16>, vector<17x8xbf16>, vector<17x8xf32> -> vector<17x8xf32>
    %122 = tpu.concatenate %58, %79, %100, %121 in 1 : vector<17x8xf32>, vector<17x8xf32>, vector<17x8xf32>, vector<17x8xf32> -> vector<17x32xf32>
    %123 = arith.truncf %122 : vector<17x32xf32> to vector<17x32xbf16>
    %c0_39 = arith.constant 0 : index
    %c0_40 = arith.constant 0 : index
    %c0_41 = arith.constant 0 : index
    %124 = vector.load %arg7[%c0_39, %c0_40, %c0_41] : memref<1x32x32xbf16, #tpu.memory_space<vmem>>, vector<1x32x32xbf16>
    %125 = vector.shape_cast %124 : vector<1x32x32xbf16> to vector<32x32xbf16>
    %cst_42 = arith.constant dense<0.000000e+00> : vector<17x32xf32>
    %126 = tpu.matmul %123, %125, %cst_42 {dimension_numbers = #tpu.dot_dimension_numbers<[1], [0], [0], [1], [0, 0, 1, 1], [], []>} : vector<17x32xbf16>, vector<32x32xbf16>, vector<17x32xf32> -> vector<17x32xf32>
    %c0_43 = arith.constant 0 : index
    %c0_44 = arith.constant 0 : index
    %c0_45 = arith.constant 0 : index
    %127 = vector.load %arg8[%c0_43, %c0_44, %c0_45] : memref<1x1x32xf32, #tpu.memory_space<vmem>>, vector<1x1x32xf32>
    %128 = vector.shape_cast %127 : vector<1x1x32xf32> to vector<1x32xf32>
    %129 = vector.broadcast %128 : vector<1x32xf32> to vector<17x32xf32>
    %130 = arith.addf %126, %129 : vector<17x32xf32>
    %131 = arith.addf %3, %130 : vector<17x32xf32>
    %c0_46 = arith.constant 0 : index
    %c0_47 = arith.constant 0 : index
    %c0_48 = arith.constant 0 : index
    %132 = vector.load %arg9[%c0_46, %c0_47, %c0_48] : memref<1x1x32xf32, #tpu.memory_space<vmem>>, vector<1x1x32xf32>
    %133 = vector.shape_cast %132 : vector<1x1x32xf32> to vector<1x32xf32>
    %c0_49 = arith.constant 0 : index
    %c0_50 = arith.constant 0 : index
    %c0_51 = arith.constant 0 : index
    %134 = vector.load %arg10[%c0_49, %c0_50, %c0_51] : memref<1x1x32xf32, #tpu.memory_space<vmem>>, vector<1x1x32xf32>
    %135 = vector.shape_cast %134 : vector<1x1x32xf32> to vector<1x32xf32>
    %cst_52 = arith.constant dense<0.000000e+00> : vector<17xf32>
    %136 = vector.multi_reduction <add>, %131, %cst_52 [1] : vector<17x32xf32> to vector<17xf32>
    %137 = vector.shape_cast %136 : vector<17xf32> to vector<17x1xf32>
    %cst_53 = arith.constant 3.200000e+01 : f32
    %138 = vector.broadcast %cst_53 : f32 to vector<17x1xf32>
    %139 = arith.divf %137, %138 : vector<17x1xf32>
    %140 = vector.broadcast %139 : vector<17x1xf32> to vector<17x32xf32>
    %141 = arith.subf %131, %140 : vector<17x32xf32>
    %142 = arith.mulf %141, %141 : vector<17x32xf32>
    %cst_54 = arith.constant dense<0.000000e+00> : vector<17xf32>
    %143 = vector.multi_reduction <add>, %142, %cst_54 [1] : vector<17x32xf32> to vector<17xf32>
    %144 = vector.shape_cast %143 : vector<17xf32> to vector<17x1xf32>
    %cst_55 = arith.constant 3.200000e+01 : f32
    %145 = vector.broadcast %cst_55 : f32 to vector<17x1xf32>
    %146 = arith.divf %144, %145 : vector<17x1xf32>
    %147 = vector.broadcast %139 : vector<17x1xf32> to vector<17x32xf32>
    %148 = arith.subf %131, %147 : vector<17x32xf32>
    %cst_56 = arith.constant 9.99999974E-6 : f32
    %149 = vector.broadcast %cst_56 : f32 to vector<17x1xf32>
    %150 = arith.addf %146, %149 : vector<17x1xf32>
    %151 = math.rsqrt %150 : vector<17x1xf32>
    %152 = vector.broadcast %151 : vector<17x1xf32> to vector<17x32xf32>
    %153 = arith.mulf %148, %152 : vector<17x32xf32>
    %154 = vector.broadcast %133 : vector<1x32xf32> to vector<17x32xf32>
    %155 = arith.mulf %153, %154 : vector<17x32xf32>
    %156 = vector.broadcast %135 : vector<1x32xf32> to vector<17x32xf32>
    %157 = arith.addf %155, %156 : vector<17x32xf32>
    %158 = arith.truncf %157 : vector<17x32xf32> to vector<17x32xbf16>
    %c0_57 = arith.constant 0 : index
    %c0_58 = arith.constant 0 : index
    %c0_59 = arith.constant 0 : index
    %159 = vector.load %arg11[%c0_57, %c0_58, %c0_59] : memref<1x32x64xbf16, #tpu.memory_space<vmem>>, vector<1x32x64xbf16>
    %160 = vector.shape_cast %159 : vector<1x32x64xbf16> to vector<32x64xbf16>
    %cst_60 = arith.constant dense<0.000000e+00> : vector<17x64xf32>
    %161 = tpu.matmul %158, %160, %cst_60 {dimension_numbers = #tpu.dot_dimension_numbers<[1], [0], [0], [1], [0, 0, 1, 1], [], []>} : vector<17x32xbf16>, vector<32x64xbf16>, vector<17x64xf32> -> vector<17x64xf32>
    %c0_61 = arith.constant 0 : index
    %c0_62 = arith.constant 0 : index
    %c0_63 = arith.constant 0 : index
    %162 = vector.load %arg12[%c0_61, %c0_62, %c0_63] : memref<1x1x64xf32, #tpu.memory_space<vmem>>, vector<1x1x64xf32>
    %163 = vector.shape_cast %162 : vector<1x1x64xf32> to vector<1x64xf32>
    %164 = vector.broadcast %163 : vector<1x64xf32> to vector<17x64xf32>
    %165 = arith.addf %161, %164 : vector<17x64xf32>
    %cst_64 = arith.constant 0.000000e+00 : f32
    %166 = vector.broadcast %cst_64 : f32 to vector<17x64xf32>
    %167 = arith.maximumf %165, %166 : vector<17x64xf32>
    %168 = arith.truncf %167 : vector<17x64xf32> to vector<17x64xbf16>
    %c0_65 = arith.constant 0 : index
    %c0_66 = arith.constant 0 : index
    %c0_67 = arith.constant 0 : index
    %169 = vector.load %arg13[%c0_65, %c0_66, %c0_67] : memref<1x64x32xbf16, #tpu.memory_space<vmem>>, vector<1x64x32xbf16>
    %170 = vector.shape_cast %169 : vector<1x64x32xbf16> to vector<64x32xbf16>
    %cst_68 = arith.constant dense<0.000000e+00> : vector<17x32xf32>
    %171 = tpu.matmul %168, %170, %cst_68 {dimension_numbers = #tpu.dot_dimension_numbers<[1], [0], [0], [1], [0, 0, 1, 1], [], []>} : vector<17x64xbf16>, vector<64x32xbf16>, vector<17x32xf32> -> vector<17x32xf32>
    %c0_69 = arith.constant 0 : index
    %c0_70 = arith.constant 0 : index
    %c0_71 = arith.constant 0 : index
    %172 = vector.load %arg14[%c0_69, %c0_70, %c0_71] : memref<1x1x32xf32, #tpu.memory_space<vmem>>, vector<1x1x32xf32>
    %173 = vector.shape_cast %172 : vector<1x1x32xf32> to vector<1x32xf32>
    %174 = vector.broadcast %173 : vector<1x32xf32> to vector<17x32xf32>
    %175 = arith.addf %171, %174 : vector<17x32xf32>
    %176 = arith.addf %131, %175 : vector<17x32xf32>
    %c0_72 = arith.constant 0 : index
    %c0_73 = arith.constant 0 : index
    %177 = vector.load %arg20[%c0_72, %c0_73] : memref<17x32xf32, #tpu.memory_space<vmem>>, vector<17x32xf32>
    tpu.vector_store %arg20[%c0_72, %c0_73], %176 {strides = array<i32>} : memref<17x32xf32, #tpu.memory_space<vmem>>, vector<17x32xf32>,
    %c1_i32 = arith.constant 1 : i32
    %178 = arith.cmpi eq, %arg1, %c1_i32 : i32
    %179 = arith.extui %178 : i1 to i32
    %c0_i32_74 = arith.constant 0 : i32
    %180 = arith.cmpi ne, %179, %c0_i32_74 : i32
    scf.if %180 {
      %181 = vector.extract_strided_slice %176 {offsets = [0, 0], sizes = [1, 32], strides = [1, 1]} : vector<17x32xf32> to vector<1x32xf32>
      %c0_75 = arith.constant 0 : index
      %c0_76 = arith.constant 0 : index
      %182 = vector.load %arg15[%c0_75, %c0_76] : memref<1x32xf32, #tpu.memory_space<vmem>>, vector<1x32xf32>
      %c0_77 = arith.constant 0 : index
      %c0_78 = arith.constant 0 : index
      %183 = vector.load %arg16[%c0_77, %c0_78] : memref<1x32xf32, #tpu.memory_space<vmem>>, vector<1x32xf32>
      %cst_79 = arith.constant dense<0.000000e+00> : vector<1xf32>
      %184 = vector.multi_reduction <add>, %181, %cst_79 [1] : vector<1x32xf32> to vector<1xf32>
      %185 = vector.shape_cast %184 : vector<1xf32> to vector<1x1xf32>
      %cst_80 = arith.constant 3.200000e+01 : f32
      %186 = vector.broadcast %cst_80 : f32 to vector<1x1xf32>
      %187 = arith.divf %185, %186 : vector<1x1xf32>
      %188 = vector.broadcast %187 : vector<1x1xf32> to vector<1x32xf32>
      %189 = arith.subf %181, %188 : vector<1x32xf32>
      %190 = arith.mulf %189, %189 : vector<1x32xf32>
      %cst_81 = arith.constant dense<0.000000e+00> : vector<1xf32>
      %191 = vector.multi_reduction <add>, %190, %cst_81 [1] : vector<1x32xf32> to vector<1xf32>
      %192 = vector.shape_cast %191 : vector<1xf32> to vector<1x1xf32>
      %cst_82 = arith.constant 3.200000e+01 : f32
      %193 = vector.broadcast %cst_82 : f32 to vector<1x1xf32>
      %194 = arith.divf %192, %193 : vector<1x1xf32>
      %195 = vector.broadcast %187 : vector<1x1xf32> to vector<1x32xf32>
      %196 = arith.subf %181, %195 : vector<1x32xf32>
      %cst_83 = arith.constant 9.99999974E-6 : f32
      %197 = vector.broadcast %cst_83 : f32 to vector<1x1xf32>
      %198 = arith.addf %194, %197 : vector<1x1xf32>
      %199 = math.rsqrt %198 : vector<1x1xf32>
      %200 = vector.broadcast %199 : vector<1x1xf32> to vector<1x32xf32>
      %201 = arith.mulf %196, %200 : vector<1x32xf32>
      %202 = arith.mulf %201, %182 : vector<1x32xf32>
      %203 = arith.addf %202, %183 : vector<1x32xf32>
      %204 = arith.truncf %203 : vector<1x32xf32> to vector<1x32xbf16>
      %c0_84 = arith.constant 0 : index
      %c0_85 = arith.constant 0 : index
      %205 = vector.load %arg17[%c0_84, %c0_85] : memref<32x8xbf16, #tpu.memory_space<vmem>>, vector<32x8xbf16>
      %cst_86 = arith.constant dense<0.000000e+00> : vector<1x8xf32>
      %206 = tpu.matmul %204, %205, %cst_86 {dimension_numbers = #tpu.dot_dimension_numbers<[1], [0], [0], [1], [0, 0, 1, 1], [], []>} : vector<1x32xbf16>, vector<32x8xbf16>, vector<1x8xf32> -> vector<1x8xf32>
      %c0_87 = arith.constant 0 : index
      %c0_88 = arith.constant 0 : index
      %207 = vector.load %arg18[%c0_87, %c0_88] : memref<1x8xf32, #tpu.memory_space<vmem>>, vector<1x8xf32>
      %208 = arith.addf %206, %207 : vector<1x8xf32>
      %c0_89 = arith.constant 0 : index
      %c0_90 = arith.constant 0 : index
      %c0_91 = arith.constant 0 : index
      %209 = vector.load %arg19[%c0_89, %c0_90, %c0_91] : memref<1x1x8xf32, #tpu.memory_space<vmem>>, vector<1x1x8xf32>
      %210 = vector.shape_cast %209 : vector<1x1x8xf32> to vector<1x8xf32>
      %211 = vector.shape_cast %208 : vector<1x8xf32> to vector<1x1x8xf32>
      tpu.vector_store %arg19[%c0_89, %c0_90, %c0_91], %211 {strides = array<i32>} : memref<1x1x8xf32, #tpu.memory_space<vmem>>, vector<1x1x8xf32>,
    } else {
    }
    return
  }
  func.func @transform_0(%arg0: i32, %arg1: i32) -> (i32, i32, i32) {
    %c0_i32 = arith.constant 0 : i32
    %c0_i32_0 = arith.constant 0 : i32
    %c0_i32_1 = arith.constant 0 : i32
    return %arg0, %c0_i32, %c0_i32_0 : i32, i32, i32
  }
  func.func @transform_1(%arg0: i32, %arg1: i32) -> (i32, i32, i32) {
    %c0_i32 = arith.constant 0 : i32
    %c0_i32_0 = arith.constant 0 : i32
    %c0_i32_1 = arith.constant 0 : i32
    return %arg1, %c0_i32, %c0_i32_0 : i32, i32, i32
  }
  func.func @transform_2(%arg0: i32, %arg1: i32) -> (i32, i32, i32) {
    %c0_i32 = arith.constant 0 : i32
    %c0_i32_0 = arith.constant 0 : i32
    %c0_i32_1 = arith.constant 0 : i32
    return %arg1, %c0_i32, %c0_i32_0 : i32, i32, i32
  }
  func.func @transform_3(%arg0: i32, %arg1: i32) -> (i32, i32, i32) {
    %c0_i32 = arith.constant 0 : i32
    %c0_i32_0 = arith.constant 0 : i32
    %c0_i32_1 = arith.constant 0 : i32
    return %arg1, %c0_i32, %c0_i32_0 : i32, i32, i32
  }
  func.func @transform_4(%arg0: i32, %arg1: i32) -> (i32, i32, i32) {
    %c0_i32 = arith.constant 0 : i32
    %c0_i32_0 = arith.constant 0 : i32
    %c0_i32_1 = arith.constant 0 : i32
    return %arg1, %c0_i32, %c0_i32_0 : i32, i32, i32
  }
  func.func @transform_5(%arg0: i32, %arg1: i32) -> (i32, i32, i32) {
    %c0_i32 = arith.constant 0 : i32
    %c0_i32_0 = arith.constant 0 : i32
    %c0_i32_1 = arith.constant 0 : i32
    return %arg1, %c0_i32, %c0_i32_0 : i32, i32, i32
  }
  func.func @transform_6(%arg0: i32, %arg1: i32) -> (i32, i32, i32) {
    %c0_i32 = arith.constant 0 : i32
    %c0_i32_0 = arith.constant 0 : i32
    %c0_i32_1 = arith.constant 0 : i32
    return %arg1, %c0_i32, %c0_i32_0 : i32, i32, i32
  }
  func.func @transform_7(%arg0: i32, %arg1: i32) -> (i32, i32, i32) {
    %c0_i32 = arith.constant 0 : i32
    %c0_i32_0 = arith.constant 0 : i32
    %c0_i32_1 = arith.constant 0 : i32
    return %arg1, %c0_i32, %c0_i32_0 : i32, i32, i32
  }
  func.func @transform_8(%arg0: i32, %arg1: i32) -> (i32, i32, i32) {
    %c0_i32 = arith.constant 0 : i32
    %c0_i32_0 = arith.constant 0 : i32
    %c0_i32_1 = arith.constant 0 : i32
    return %arg1, %c0_i32, %c0_i32_0 : i32, i32, i32
  }
  func.func @transform_9(%arg0: i32, %arg1: i32) -> (i32, i32, i32) {
    %c0_i32 = arith.constant 0 : i32
    %c0_i32_0 = arith.constant 0 : i32
    %c0_i32_1 = arith.constant 0 : i32
    return %arg1, %c0_i32, %c0_i32_0 : i32, i32, i32
  }
  func.func @transform_10(%arg0: i32, %arg1: i32) -> (i32, i32, i32) {
    %c0_i32 = arith.constant 0 : i32
    %c0_i32_0 = arith.constant 0 : i32
    %c0_i32_1 = arith.constant 0 : i32
    return %arg1, %c0_i32, %c0_i32_0 : i32, i32, i32
  }
  func.func @transform_11(%arg0: i32, %arg1: i32) -> (i32, i32, i32) {
    %c0_i32 = arith.constant 0 : i32
    %c0_i32_0 = arith.constant 0 : i32
    %c0_i32_1 = arith.constant 0 : i32
    return %arg1, %c0_i32, %c0_i32_0 : i32, i32, i32
  }
  func.func @transform_12(%arg0: i32, %arg1: i32) -> (i32, i32, i32) {
    %c0_i32 = arith.constant 0 : i32
    %c0_i32_0 = arith.constant 0 : i32
    %c0_i32_1 = arith.constant 0 : i32
    return %arg1, %c0_i32, %c0_i32_0 : i32, i32, i32
  }
  func.func @transform_13(%arg0: i32, %arg1: i32) -> (i32, i32) {
    %c0_i32 = arith.constant 0 : i32
    %c0_i32_0 = arith.constant 0 : i32
    %c0_i32_1 = arith.constant 0 : i32
    return %c0_i32, %c0_i32_0 : i32, i32
  }
  func.func @transform_14(%arg0: i32, %arg1: i32) -> (i32, i32) {
    %c0_i32 = arith.constant 0 : i32
    %c0_i32_0 = arith.constant 0 : i32
    %c0_i32_1 = arith.constant 0 : i32
    return %c0_i32, %c0_i32_0 : i32, i32
  }
  func.func @transform_15(%arg0: i32, %arg1: i32) -> (i32, i32) {
    %c0_i32 = arith.constant 0 : i32
    %c0_i32_0 = arith.constant 0 : i32
    %c0_i32_1 = arith.constant 0 : i32
    return %c0_i32, %c0_i32_0 : i32, i32
  }
  func.func @transform_16(%arg0: i32, %arg1: i32) -> (i32, i32) {
    %c0_i32 = arith.constant 0 : i32
    %c0_i32_0 = arith.constant 0 : i32
    %c0_i32_1 = arith.constant 0 : i32
    return %c0_i32, %c0_i32_0 : i32, i32
  }
  func.func @transform_17(%arg0: i32, %arg1: i32) -> (i32, i32, i32) {
    %c0_i32 = arith.constant 0 : i32
    %c0_i32_0 = arith.constant 0 : i32
    %c0_i32_1 = arith.constant 0 : i32
    return %arg0, %c0_i32, %c0_i32_0 : i32, i32, i32
  }
}

</mosaic_0001>

<llo_original>
// kernel: vit_forward.2
$region0: #{vit_forward.2}
  #allocation0 [shape = 'u32[]', space=smem, size = 0x4, offset = 0x4, fixed_abs, tag = 'smem constant byte address 0x4 - core index']
  #allocation1 [shape = 'u32[144,128]{1,0:T(1,128)}', space=vmem, size = 0x12000, scoped, tag = 'internal scratch']
  %s0 = inlined_call_operand.vmem [shape: f32[2,16,64], index: 0, kind: input, shape index: {}]
  %s1 = inlined_call_operand.vmem [shape: bf16[64,32], index: 1, kind: input, shape index: {}]
  %s2 = inlined_call_operand.vmem [shape: f32[1,32], index: 2, kind: input, shape index: {}]
  %s3 = inlined_call_operand.vmem [shape: f32[16,32], index: 3, kind: input, shape index: {}]
  %s4 = inlined_call_operand.vmem [shape: f32[1,32], index: 4, kind: input, shape index: {}]
  %s5 = inlined_call_operand.vmem [shape: f32[2,17,32], index: 5, kind: output, shape index: {}]
  %s6 = sld [smem:[#allocation0]]
  $region53: #{vit_forward.2} parent=0
    _
  %s8 = ssub.s32 1, %s6
  %s9 = scalar_select 0, %s8, %s6
  loop: start=0, step=1, limit=4
  $region2: #{vit_forward.2} parent=0 // loop_pre_header
    _
  $region3: #{vit_forward.2} parent=0 // loop_header
    %s11 = sphi 0, %s15
    %p12 = scmp.ge.s32.totalorder %s11, 4
    %s21 = sphi 0, %s23
    %s24 = sphi 0, %s21
    %s25 = sphi 0, %s24
    %s41 = sphi 0, %s25
    %s45 = sphi 0, %s45
    %s47 = sphi 0, %s45
    %s48 = sphi 0, %s47
    %s62 = sphi 0, %s48
    %s66 = sphi 0, %s66
    %s68 = sphi 0, %s66
    %s69 = sphi 0, %s68
    %s83 = sphi 0, %s69
    %s87 = sphi 0, %s87
    %s89 = sphi 0, %s87
    %s90 = sphi 0, %s89
    %s104 = sphi 0, %s90
    %s108 = sphi 0, %s108
    %s110 = sphi 0, %s108
    %s111 = sphi 0, %s110
    %s125 = sphi 0, %s111
    %s131 = sphi 0, %s133
    %s134 = sphi 0, %s131
    %s135 = sphi 0, %s134
    %s151 = sphi 0, %s135
  $region4: #{vit_forward.2} parent=0 // loop_header_branch
    %14 = sbr.rel (%p12) target = $region8
  $region5: #{vit_forward.2} parent=0 // loop_body
    %s16 = ssub.s32 %s11, 1
    %s17 = ssub.s32 %s11, 2
    %s18 = sadd.s32 %s11, 1
    %s19 = ssub.s32 %s11, %s18
    %p20 = scmp.eq.s32.totalorder %s19, 0
    %s22 = sadd.s32 %s21, 1
    %s23 = scalar_select %p20, %s21, %s22
    %p26 = pneg %p20
    %p27 = scmp.eq.s32.totalorder %s11, 1
    %p28 = por %p26, %p27
    %p29 = scmp.ne.s32.totalorder %s21, %s24
    %p30 = scmp.eq.s32.totalorder %s11, 0
    %p31 = por %p29, %p30
    %p32 = scmp.ne.s32.totalorder %s21, %s24
    %p33 = scmp.eq.s32.totalorder %s16, 1
    %p34 = por %p32, %p33
    %p35 = scmp.ne.s32.totalorder %s24, %s25
    %p36 = scmp.eq.s32.totalorder %s16, 0
    %p37 = por %p35, %p36
    %p38 = scmp.ne.s32.totalorder %s24, %s25
    %p39 = scmp.eq.s32.totalorder %s17, 1
    %p40 = por %p38, %p39
    %p42 = scmp.ne.s32.totalorder %s25, %s41
    %p43 = scmp.eq.s32.totalorder %s17, 0
    %p44 = por %p42, %p43
    %s46 = sadd.s32 %s45, 1
    %p49 = scmp.eq.s32.totalorder %s11, 1
    %p50 = scmp.ne.s32.totalorder %s45, %s47
    %p51 = scmp.eq.s32.totalorder %s11, 0
    %p52 = por %p50, %p51
    %p53 = scmp.ne.s32.totalorder %s45, %s47
    %p54 = scmp.eq.s32.totalorder %s16, 1
    %p55 = por %p53, %p54
    %p56 = scmp.ne.s32.totalorder %s47, %s48
    %p57 = scmp.eq.s32.totalorder %s16, 0
    %p58 = por %p56, %p57
    %p59 = scmp.ne.s32.totalorder %s47, %s48
    %p60 = scmp.eq.s32.totalorder %s17, 1
    %p61 = por %p59, %p60
    %p63 = scmp.ne.s32.totalorder %s48, %s62
    %p64 = scmp.eq.s32.totalorder %s17, 0
    %p65 = por %p63, %p64
    %s67 = sadd.s32 %s66, 1
    %p70 = scmp.eq.s32.totalorder %s11, 1
    %p71 = scmp.ne.s32.totalorder %s66, %s68
    %p72 = scmp.eq.s32.totalorder %s11, 0
    %p73 = por %p71, %p72
    %p74 = scmp.ne.s32.totalorder %s66, %s68
    %p75 = scmp.eq.s32.totalorder %s16, 1
    %p76 = por %p74, %p75
    %p77 = scmp.ne.s32.totalorder %s68, %s69
    %p78 = scmp.eq.s32.totalorder %s16, 0
    %p79 = por %p77, %p78
    %p80 = scmp.ne.s32.totalorder %s68, %s69
    %p81 = scmp.eq.s32.totalorder %s17, 1
    %p82 = por %p80, %p81
    %p84 = scmp.ne.s32.totalorder %s69, %s83
    %p85 = scmp.eq.s32.totalorder %s17, 0
    %p86 = por %p84, %p85
    %s88 = sadd.s32 %s87, 1
    %p91 = scmp.eq.s32.totalorder %s11, 1
    %p92 = scmp.ne.s32.totalorder %s87, %s89
    %p93 = scmp.eq.s32.totalorder %s11, 0
    %p94 = por %p92, %p93
    %p95 = scmp.ne.s32.totalorder %s87, %s89
    %p96 = scmp.eq.s32.totalorder %s16, 1
    %p97 = por %p95, %p96
    %p98 = scmp.ne.s32.totalorder %s89, %s90
    %p99 = scmp.eq.s32.totalorder %s16, 0
    %p100 = por %p98, %p99
    %p101 = scmp.ne.s32.totalorder %s89, %s90
    %p102 = scmp.eq.s32.totalorder %s17, 1
    %p103 = por %p101, %p102
    %p105 = scmp.ne.s32.totalorder %s90, %s104
    %p106 = scmp.eq.s32.totalorder %s17, 0
    %p107 = por %p105, %p106
    %s109 = sadd.s32 %s108, 1
    %p112 = scmp.eq.s32.totalorder %s11, 1
    %p113 = scmp.ne.s32.totalorder %s108, %s110
    %p114 = scmp.eq.s32.totalorder %s11, 0
    %p115 = por %p113, %p114
    %p116 = scmp.ne.s32.totalorder %s108, %s110
    %p117 = scmp.eq.s32.totalorder %s16, 1
    %p118 = por %p116, %p117
    %p119 = scmp.ne.s32.totalorder %s110, %s111
    %p120 = scmp.eq.s32.totalorder %s16, 0
    %p121 = por %p119, %p120
    %p122 = scmp.ne.s32.totalorder %s110, %s111
    %p123 = scmp.eq.s32.totalorder %s17, 1
    %p124 = por %p122, %p123
    %p126 = scmp.ne.s32.totalorder %s111, %s125
    %p127 = scmp.eq.s32.totalorder %s17, 0
    %p128 = por %p126, %p127
    %s129 = ssub.s32 %s11, %s18
    %p130 = scmp.eq.s32.totalorder %s129, 0
    %s132 = sadd.s32 %s131, 1
    %s133 = scalar_select %p130, %s131, %s132
    %p136 = pneg %p130
    %p137 = scmp.eq.s32.totalorder %s11, 1
    %p138 = por %p136, %p137
    %p139 = scmp.ne.s32.totalorder %s131, %s134
    %p140 = scmp.eq.s32.totalorder %s11, 0
    %p141 = por %p139, %p140
    %p142 = scmp.ne.s32.totalorder %s131, %s134
    %p143 = scmp.eq.s32.totalorder %s16, 1
    %p144 = por %p142, %p143
    %p145 = scmp.ne.s32.totalorder %s134, %s135
    %p146 = scmp.eq.s32.totalorder %s16, 0
    %p147 = por %p145, %p146
    %p148 = scmp.ne.s32.totalorder %s134, %s135
    %p149 = scmp.eq.s32.totalorder %s17, 1
    %p150 = por %p148, %p149
    %p152 = scmp.ne.s32.totalorder %s135, %s151
    %p153 = scmp.eq.s32.totalorder %s17, 0
    %p154 = por %p152, %p153
    %p155 = scmp.le.s32.totalorder 1, %s11
    %p156 = scmp.lt.s32.totalorder %s11, 3
    %p157 = pnand %p155, %p156
    %p158 = pneg %p157
    // Predicated region
    $region9: #{vit_forward.2} parent=5 // pred_check
      _
    $region10: #{vit_forward.2} parent=5 // pred_check_branch
      %160 = sbr.rel (%p157) target = $region12
    $region11: #{vit_forward.2} parent=5 // pred_region
      %s161 = ssub.s32 %s11, 1
      // Predicated region
      $region13: #{vit_forward.2} parent=11 // pred_check
        %p162 = pneg %p58
      $region14: #{vit_forward.2} parent=11 // pred_check_branch
        %164 = sbr.rel (%p162) target = $region16
      $region15: #{vit_forward.2} parent=11 // pred_region
        _
      $region16: #{vit_forward.2} parent=11 // pred_fallthru
        _
      // Predicated region
      $region17: #{vit_forward.2} parent=11 // pred_check
        %p165 = pneg %p79
      $region18: #{vit_forward.2} parent=11 // pred_check_branch
        %167 = sbr.rel (%p165) target = $region20
      $region19: #{vit_forward.2} parent=11 // pred_region
        _
      $region20: #{vit_forward.2} parent=11 // pred_fallthru
        _
      // Predicated region
      $region21: #{vit_forward.2} parent=11 // pred_check
        %p168 = pneg %p100
      $region22: #{vit_forward.2} parent=11 // pred_check_branch
        %170 = sbr.rel (%p168) target = $region24
      $region23: #{vit_forward.2} parent=11 // pred_region
        _
      $region24: #{vit_forward.2} parent=11 // pred_fallthru
        _
      // Predicated region
      $region25: #{vit_forward.2} parent=11 // pred_check
        %p171 = pneg %p121
      $region26: #{vit_forward.2} parent=11 // pred_check_branch
        %173 = sbr.rel (%p171) target = $region28
      $region27: #{vit_forward.2} parent=11 // pred_region
        _
      $region28: #{vit_forward.2} parent=11 // pred_fallthru
        _
    $region12: #{vit_forward.2} parent=5 // pred_fallthru
      _
    %p174 = scmp.lt.s32.totalorder %s11, 2
    // Predicated region
    $region29: #{vit_forward.2} parent=5 // pred_check
      %p175 = pneg %p174
    $region30: #{vit_forward.2} parent=5 // pred_check_branch
      %177 = sbr.rel (%p175) target = $region32
    $region31: #{vit_forward.2} parent=5 // pred_region
      // Predicated region
      $region33: #{vit_forward.2} parent=31 // pred_check
        %p178 = pneg %p31
      $region34: #{vit_forward.2} parent=31 // pred_check_branch
        %180 = sbr.rel (%p178) target = $region36
      $region35: #{vit_forward.2} parent=31 // pred_region
        %p181 = scmp.lt.s32.totalorder %s11, 1
        %s182 = scalar_select %p181, %s11, 1
        %s183 = smul.addr %s182, 2
        %s184 = smul.addr %s183, 8
        %s185 = scalar_lea.vmem %s0, %s184
      $region36: #{vit_forward.2} parent=31 // pred_fallthru
        _
    $region32: #{vit_forward.2} parent=5 // pred_fallthru
      _
    %p186 = scmp.le.s32.totalorder 1, %s11
    %p187 = scmp.lt.s32.totalorder %s11, 3
    %p188 = pnand %p186, %p187
    %p189 = pneg %p188
    // Predicated region
    $region37: #{vit_forward.2} parent=5 // pred_check
      _
    $region38: #{vit_forward.2} parent=5 // pred_check_branch
      %191 = sbr.rel (%p188) target = $region40
    $region39: #{vit_forward.2} parent=5 // pred_region
      %s192 = ssub.s32 %s11, 1
      %p193 = scmp.lt.s32.totalorder %s16, 1
      %s194 = scalar_select %p193, %s16, 1
      %s195 = smul.addr %s194, 2
      %s196 = smul.addr %s195, 8
      %s197 = scalar_lea.vmem %s0, %s196
      %p198 = pneg %p37
      %p199 = pneg %p34
      %p200 = pneg %p58
      %p201 = pneg %p55
      %p202 = pneg %p79
      %p203 = pneg %p76
      %p204 = pneg %p100
      %p205 = pneg %p97
      %p206 = pneg %p121
      %p207 = pneg %p118
      %p208 = pneg %p147
      %p209 = pneg %p144
      %p210 = scmp.lt.s32.totalorder %s16, 1
      %s211 = scalar_select %p210, %s16, 1
      %s212 = smul.addr %s211, 3
      %s213 = smul.addr %s212, 8
      %s214 = scalar_lea.vmem %s5, %s213
      %p215 = scmp.lt.s32.totalorder %s16, 1
      %s216 = scalar_select %p215, %s16, 1
      %s217 = smul.addr %s216, 2
      %s218 = smul.addr %s217, 8
      %s219 = scalar_lea.vmem %s0, %s218
      %p220 = scmp.lt.s32.totalorder %s16, 1
      %s221 = scalar_select %p220, %s16, 1
      %s222 = smul.addr %s221, 3
      %s223 = smul.addr %s222, 8
      %s224 = scalar_lea.vmem %s5, %s223
      %v226 = vld [vmem:[%s219] sm:$0xff]
      %v227 = vld [vmem:[%s219 + $0x8] sm:$0xff]
      %v228 = vpack.c.bf16 %v227, %v226
      %v229 = vld [vmem:[%s1] sm:$0xf]
      %v230 = vld [vmem:[%s1 + $0x4] sm:$0xf]
      %v231 = vld [vmem:[%s1 + $0x8] sm:$0xf]
      %v232 = vld [vmem:[%s1 + $0xc] sm:$0xf]
      %v233 = vld [vmem:[%s1 + $0x10] sm:$0xf]
      %v234 = vld [vmem:[%s1 + $0x14] sm:$0xf]
      %v235 = vld [vmem:[%s1 + $0x18] sm:$0xf]
      %v236 = vld [vmem:[%s1 + $0x1c] sm:$0xf]
      %v237 = vld [vmem:[%s2] sm:$0x1]
      %v239 = vlaneseq
      %v240 = vshrl.u32 %v239, 7
      %v241 = vsub.s32 0, %v240
      %v242 = vrot.slane %v237, %v241
      %v252 = vunpack.c.l.b16 %v229
      %v253 = vunpack.c.l.b16 %v230
      %v254 = vunpack.c.l.b16 %v231
      %v255 = vunpack.c.l.b16 %v232
      %v256 = vunpack.c.l.b16 %v233
      %v257 = vunpack.c.l.b16 %v234
      %v258 = vunpack.c.l.b16 %v235
      %v259 = vunpack.c.l.b16 %v236
      %v260 = vpack.c.b16 %v253, %v252
      %v261 = vpack.c.b16 %v255, %v254
      %v262 = vpack.c.b16 %v257, %v256
      %v263 = vpack.c.b16 %v259, %v258
      %vm268 = vcmask 523264
      %v270 = vsel %vm268, %v228, 0
      %272 = vmatprep.subr.bf16.mxu0 0
      %273 = vmatpush1.bf16.msra.mxu0 %v260
      %274 = vmatprep.subr.bf16.mxu0 0
      %275 = vmatpush1.bf16.msra.mxu0 %v261
      %276 = vmatprep.subr.bf16.mxu0 0
      %277 = vmatpush1.bf16.msra.mxu0 %v262
      %278 = vmatprep.subr.bf16.mxu0 0
      %279 = vmatpush1.bf16.msra.mxu0 %v263
      %280 = vmatprep.subr.bf16.mxu0 0
      %281 = vmatpush1.bf16.msra.mxu0 0
      %282 = vmatprep.subr.bf16.mxu0 0
      %283 = vmatpush1.bf16.msra.mxu0 0
      %284 = vmatprep.subr.bf16.mxu0 0
      %285 = vmatpush1.bf16.msra.mxu0 0
      %286 = vmatprep.subr.bf16.mxu0 0
      %287 = vmatpush1.bf16.msra.mxu0 0
      %288 = vmatprep.subr.bf16.mxu0 0
      %289 = vmatpush1.bf16.msra.mxu0 0
      %290 = vmatprep.subr.bf16.mxu0 0
      %291 = vmatpush1.bf16.msra.mxu0 0
      %292 = vmatprep.subr.bf16.mxu0 0
      %293 = vmatpush1.bf16.msra.mxu0 0
      %294 = vmatprep.subr.bf16.mxu0 0
      %295 = vmatpush1.bf16.msra.mxu0 0
      %296 = vmatprep.subr.bf16.mxu0 0
      %297 = vmatpush1.bf16.msra.mxu0 0
      %298 = vmatprep.subr.bf16.mxu0 0
      %299 = vmatpush1.bf16.msra.mxu0 0
      %300 = vmatprep.subr.bf16.mxu0 0
      %301 = vmatpush1.bf16.msra.mxu0 0
      %302 = vmatprep.subr.bf16.mxu0 0
      %303 = vmatpush1.bf16.msra.mxu0 0
      %304 = vmatprep.mubr.bf16.mxu0 0
      %305 = vmatmul.mubr.bf16.gmra.mrb[0].mxu0 %v270
      %v306 = vpop.f32.mrb[0].mxu0
      %v307 = vadd.f32 %v242, %v306
      %v308 = vpop.f32.mrb[0].mxu0
      %v309 = vpop.f32.mrb[0].mxu0
      %v310 = vadd.f32 %v242, %v309
      %v311 = vpop.f32.mrb[0].mxu0
      %312 = vdwg.mxu0
      %v313 = vld [vmem:[%s3] sm:$0xff]
      %v314 = vld [vmem:[%s3 + $0x8] sm:$0xff]
      %v315 = vadd.f32 %v307, %v313
      %v316 = vadd.f32 %v310, %v314
      %v317 = vld [vmem:[%s4] sm:$0x1]
      %vm320 = vcmask 1040384
      %v321 = vrot.slane %v315, 7
      %v322 = vrot.slane %v316, 7
      %v323 = vsel %vm320, %v321, %v322
      %v327 = vsel %vm320, %v317, %v321
      %vm328 = vcmask 261120
      %329 = vst.msk [vmem:[%s224] sm:$0xff] %vm328, %v327
      %330 = vst.msk [vmem:[%s224 + $0x8] sm:$0xff] %vm328, %v323
      %vm331 = vcmask 253952
      %332 = vst.msk [vmem:[%s224 + $0x10] sm:$0x1] %vm331, %v322
      %p333 = scmp.lt.s32.totalorder %s16, 1
      %s334 = scalar_select %p333, %s16, 1
      %s335 = smul.addr %s334, 3
      %s336 = smul.addr %s335, 8
      %s337 = scalar_lea.vmem %s5, %s336
      // Predicated region
      $region41: #{vit_forward.2} parent=39 // pred_check
        %p338 = pneg %p144
      $region42: #{vit_forward.2} parent=39 // pred_check_branch
        %340 = sbr.rel (%p338) target = $region44
      $region43: #{vit_forward.2} parent=39 // pred_region
        _
      $region44: #{vit_forward.2} parent=39 // pred_fallthru
        _
    $region40: #{vit_forward.2} parent=5 // pred_fallthru
      _
    %p341 = scmp.le.s32.totalorder 2, %s11
    // Predicated region
    $region45: #{vit_forward.2} parent=5 // pred_check
      %p342 = pneg %p341
    $region46: #{vit_forward.2} parent=5 // pred_check_branch
      %344 = sbr.rel (%p342) target = $region48
    $region47: #{vit_forward.2} parent=5 // pred_region
      %s345 = ssub.s32 %s11, 2
      // Predicated region
      $region49: #{vit_forward.2} parent=47 // pred_check
        %p346 = pneg %p150
      $region50: #{vit_forward.2} parent=47 // pred_check_branch
        %348 = sbr.rel (%p346) target = $region52
      $region51: #{vit_forward.2} parent=47 // pred_region
        %p349 = scmp.lt.s32.totalorder %s17, 1
        %s350 = scalar_select %p349, %s17, 1
        %s351 = smul.addr %s350, 3
        %s352 = smul.addr %s351, 8
        %s353 = scalar_lea.vmem %s5, %s352
      $region52: #{vit_forward.2} parent=47 // pred_fallthru
        _
    $region48: #{vit_forward.2} parent=5 // pred_fallthru
      _
  $region6: #{vit_forward.2} parent=0 // loop_footer
    %s15 = sadd.s32 1, %s11
  $region7: #{vit_forward.2} parent=0 // loop_footer_branch
    %10 = sbr.rel target = $region3
  $region8: #{vit_forward.2} parent=0 // loop_exit
    _

// kernel: vit_forward.3
$region0: #{vit_forward.3}
  #allocation0 [shape = 'u32[]', space=smem, size = 0x4, offset = 0x4, fixed_abs, tag = 'smem constant byte address 0x4 - core index']
  #allocation1 [shape = 'u32[144,128]{1,0:T(1,128)}', space=vmem, size = 0x12000, scoped, tag = 'internal scratch']
  #allocation2 [shape = 'f32[17,32]{1,0:T(8,128)}', space=vmem, size = 0x3000, scoped, tag = 'scratch operand']
  %s0 = inlined_call_operand.vmem [shape: f32[2,17,32], index: 0, kind: input, shape index: {}]
  %s1 = inlined_call_operand.vmem [shape: f32[2,1,32], index: 1, kind: input, shape index: {}]
  %s2 = inlined_call_operand.vmem [shape: f32[2,1,32], index: 2, kind: input, shape index: {}]
  %s3 = inlined_call_operand.vmem [shape: bf16[2,32,96], index: 3, kind: input, shape index: {}]
  %s4 = inlined_call_operand.vmem [shape: f32[2,1,96], index: 4, kind: input, shape index: {}]
  %s5 = inlined_call_operand.vmem [shape: bf16[2,32,32], index: 5, kind: input, shape index: {}]
  %s6 = inlined_call_operand.vmem [shape: f32[2,1,32], index: 6, kind: input, shape index: {}]
  %s7 = inlined_call_operand.vmem [shape: f32[2,1,32], index: 7, kind: input, shape index: {}]
  %s8 = inlined_call_operand.vmem [shape: f32[2,1,32], index: 8, kind: input, shape index: {}]
  %s9 = inlined_call_operand.vmem [shape: bf16[2,32,64], index: 9, kind: input, shape index: {}]
  %s10 = inlined_call_operand.vmem [shape: f32[2,1,64], index: 10, kind: input, shape index: {}]
  %s11 = inlined_call_operand.vmem [shape: bf16[2,64,32], index: 11, kind: input, shape index: {}]
  %s12 = inlined_call_operand.vmem [shape: f32[2,1,32], index: 12, kind: input, shape index: {}]
  %s13 = inlined_call_operand.vmem [shape: f32[1,32], index: 13, kind: input, shape index: {}]
  %s14 = inlined_call_operand.vmem [shape: f32[1,32], index: 14, kind: input, shape index: {}]
  %s15 = inlined_call_operand.vmem [shape: bf16[32,8], index: 15, kind: input, shape index: {}]
  %s16 = inlined_call_operand.vmem [shape: f32[1,8], index: 16, kind: input, shape index: {}]
  %s17 = inlined_call_operand.hbm [shape: f32[2,1,8], index: 17, kind: output, shape index: {}]
  %s18 = sld [smem:[#allocation0]]
  $region109: #{vit_forward.3} parent=0
    _
  %s20 = ssub.s32 1, %s18
  %s21 = scalar_select 0, %s20, %s18
  $region1: #{vit_forward.3} parent=0
    #allocation3 [shape = 'u8[1024]{0}', space=vmem, size = 0x400, scoped, tag = 'output window, operand 0']
    #allocation4 [shape = 's32[2]{0}', space=sflag, size = 0x8, scoped, tag = 'scoped memory for vit_forward.3']
    %22 = vsyncpa [#allocation4], 0
    %s23 = scalar_lea.sflag [#allocation4], 1
    %24 = vsyncpa %s23, 0
    loop: start=0, step=1, limit=6
    $region2: #{vit_forward.3} parent=1 // loop_pre_header
      _
    $region3: #{vit_forward.3} parent=1 // loop_header
      %s26 = sphi 0, %s30
      %p27 = scmp.ge.s32.totalorder %s26, 6
      %s33 = sphi 0, %s45
      %s34 = sphi 0, %s41
      %s35 = sphi 0, %s33
      %s36 = sphi 0, %s34
      %s37 = sphi 0, %s35
      %s38 = sphi 0, %s36
      %s48 = sphi 0, %s50
      %s51 = sphi 0, %s48
      %s52 = sphi 0, %s51
      %s68 = sphi 0, %s52
      %s74 = sphi 0, %s76
      %s77 = sphi 0, %s74
      %s78 = sphi 0, %s77
      %s94 = sphi 0, %s78
      %s100 = sphi 0, %s102
      %s103 = sphi 0, %s100
      %s104 = sphi 0, %s103
      %s120 = sphi 0, %s104
      %s126 = sphi 0, %s128
      %s129 = sphi 0, %s126
      %s130 = sphi 0, %s129
      %s146 = sphi 0, %s130
      %s152 = sphi 0, %s154
      %s155 = sphi 0, %s152
      %s156 = sphi 0, %s155
      %s172 = sphi 0, %s156
      %s178 = sphi 0, %s180
      %s181 = sphi 0, %s178
      %s182 = sphi 0, %s181
      %s198 = sphi 0, %s182
      %s204 = sphi 0, %s206
      %s207 = sphi 0, %s204
      %s208 = sphi 0, %s207
      %s224 = sphi 0, %s208
      %s230 = sphi 0, %s232
      %s233 = sphi 0, %s230
      %s234 = sphi 0, %s233
      %s250 = sphi 0, %s234
      %s256 = sphi 0, %s258
      %s259 = sphi 0, %s256
      %s260 = sphi 0, %s259
      %s276 = sphi 0, %s260
      %s282 = sphi 0, %s284
      %s285 = sphi 0, %s282
      %s286 = sphi 0, %s285
      %s302 = sphi 0, %s286
      %s308 = sphi 0, %s310
      %s311 = sphi 0, %s308
      %s312 = sphi 0, %s311
      %s328 = sphi 0, %s312
      %s334 = sphi 0, %s336
      %s337 = sphi 0, %s334
      %s338 = sphi 0, %s337
      %s354 = sphi 0, %s338
      %s360 = sphi 0, %s362
      %s363 = sphi 0, %s360
      %s364 = sphi 0, %s363
      %s380 = sphi 0, %s364
      %s384 = sphi 0, %s384
      %s386 = sphi 0, %s384
      %s387 = sphi 0, %s386
      %s401 = sphi 0, %s387
      %s405 = sphi 0, %s405
      %s407 = sphi 0, %s405
      %s408 = sphi 0, %s407
      %s422 = sphi 0, %s408
      %s426 = sphi 0, %s426
      %s428 = sphi 0, %s426
      %s429 = sphi 0, %s428
      %s443 = sphi 0, %s429
      %s447 = sphi 0, %s447
      %s449 = sphi 0, %s447
      %s450 = sphi 0, %s449
      %s464 = sphi 0, %s450
      %s470 = sphi 0, %s472
      %s473 = sphi 0, %s470
      %s474 = sphi 0, %s473
      %s490 = sphi 0, %s474
    $region4: #{vit_forward.3} parent=1 // loop_header_branch
      %29 = sbr.rel (%p27) target = $region8
    $region5: #{vit_forward.3} parent=1 // loop_body
      %s31 = ssub.s32 %s26, 1
      %s32 = ssub.s32 %s26, 2
      %s39 = sadd.s32 1, %s34
      %p40 = scmp.ge.s32.totalorder %s39, 2
      %s41 = scalar_select %p40, 0, %s39
      %s42 = sadd.s32 1, %s33
      %s43 = scalar_select %p40, %s42, %s33
      %p44 = scmp.ge.s32.totalorder %s43, 2
      %s45 = scalar_select %p44, 0, %s43
      %s46 = ssub.s32 %s33, %s45
      %p47 = scmp.eq.s32.totalorder %s46, 0
      %s49 = sadd.s32 %s48, 1
      %s50 = scalar_select %p47, %s48, %s49
      %p53 = pneg %p47
      %p54 = scmp.eq.s32.totalorder %s26, 3
      %p55 = por %p53, %p54
      %p56 = scmp.ne.s32.totalorder %s48, %s51
      %p57 = scmp.eq.s32.totalorder %s26, 0
      %p58 = por %p56, %p57
      %p59 = scmp.ne.s32.totalorder %s48, %s51
      %p60 = scmp.eq.s32.totalorder %s31, 3
      %p61 = por %p59, %p60
      %p62 = scmp.ne.s32.totalorder %s51, %s52
      %p63 = scmp.eq.s32.totalorder %s31, 0
      %p64 = por %p62, %p63
      %p65 = scmp.ne.s32.totalorder %s51, %s52
      %p66 = scmp.eq.s32.totalorder %s32, 3
      %p67 = por %p65, %p66
      %p69 = scmp.ne.s32.totalorder %s52, %s68
      %p70 = scmp.eq.s32.totalorder %s32, 0
      %p71 = por %p69, %p70
      %s72 = ssub.s32 %s34, %s41
      %p73 = scmp.eq.s32.totalorder %s72, 0
      %s75 = sadd.s32 %s74, 1
      %s76 = scalar_select %p73, %s74, %s75
      %p79 = pneg %p73
      %p80 = scmp.eq.s32.totalorder %s26, 3
      %p81 = por %p79, %p80
      %p82 = scmp.ne.s32.totalorder %s74, %s77
      %p83 = scmp.eq.s32.totalorder %s26, 0
      %p84 = por %p82, %p83
      %p85 = scmp.ne.s32.totalorder %s74, %s77
      %p86 = scmp.eq.s32.totalorder %s31, 3
      %p87 = por %p85, %p86
      %p88 = scmp.ne.s32.totalorder %s77, %s78
      %p89 = scmp.eq.s32.totalorder %s31, 0
      %p90 = por %p88, %p89
      %p91 = scmp.ne.s32.totalorder %s77, %s78
      %p92 = scmp.eq.s32.totalorder %s32, 3
      %p93 = por %p91, %p92
      %p95 = scmp.ne.s32.totalorder %s78, %s94
      %p96 = scmp.eq.s32.totalorder %s32, 0
      %p97 = por %p95, %p96
      %s98 = ssub.s32 %s34, %s41
      %p99 = scmp.eq.s32.totalorder %s98, 0
      %s101 = sadd.s32 %s100, 1
      %s102 = scalar_select %p99, %s100, %s101
      %p105 = pneg %p99
      %p106 = scmp.eq.s32.totalorder %s26, 3
      %p107 = por %p105, %p106
      %p108 = scmp.ne.s32.totalorder %s100, %s103
      %p109 = scmp.eq.s32.totalorder %s26, 0
      %p110 = por %p108, %p109
      %p111 = scmp.ne.s32.totalorder %s100, %s103
      %p112 = scmp.eq.s32.totalorder %s31, 3
      %p113 = por %p111, %p112
      %p114 = scmp.ne.s32.totalorder %s103, %s104
      %p115 = scmp.eq.s32.totalorder %s31, 0
      %p116 = por %p114, %p115
      %p117 = scmp.ne.s32.totalorder %s103, %s104
      %p118 = scmp.eq.s32.totalorder %s32, 3
      %p119 = por %p117, %p118
      %p121 = scmp.ne.s32.totalorder %s104, %s120
      %p122 = scmp.eq.s32.totalorder %s32, 0
      %p123 = por %p121, %p122
      %s124 = ssub.s32 %s34, %s41
      %p125 = scmp.eq.s32.totalorder %s124, 0
      %s127 = sadd.s32 %s126, 1
      %s128 = scalar_select %p125, %s126, %s127
      %p131 = pneg %p125
      %p132 = scmp.eq.s32.totalorder %s26, 3
      %p133 = por %p131, %p132
      %p134 = scmp.ne.s32.totalorder %s126, %s129
      %p135 = scmp.eq.s32.totalorder %s26, 0
      %p136 = por %p134, %p135
      %p137 = scmp.ne.s32.totalorder %s126, %s129
      %p138 = scmp.eq.s32.totalorder %s31, 3
      %p139 = por %p137, %p138
      %p140 = scmp.ne.s32.totalorder %s129, %s130
      %p141 = scmp.eq.s32.totalorder %s31, 0
      %p142 = por %p140, %p141
      %p143 = scmp.ne.s32.totalorder %s129, %s130
      %p144 = scmp.eq.s32.totalorder %s32, 3
      %p145 = por %p143, %p144
      %p147 = scmp.ne.s32.totalorder %s130, %s146
      %p148 = scmp.eq.s32.totalorder %s32, 0
      %p149 = por %p147, %p148
      %s150 = ssub.s32 %s34, %s41
      %p151 = scmp.eq.s32.totalorder %s150, 0
      %s153 = sadd.s32 %s152, 1
      %s154 = scalar_select %p151, %s152, %s153
      %p157 = pneg %p151
      %p158 = scmp.eq.s32.totalorder %s26, 3
      %p159 = por %p157, %p158
      %p160 = scmp.ne.s32.totalorder %s152, %s155
      %p161 = scmp.eq.s32.totalorder %s26, 0
      %p162 = por %p160, %p161
      %p163 = scmp.ne.s32.totalorder %s152, %s155
      %p164 = scmp.eq.s32.totalorder %s31, 3
      %p165 = por %p163, %p164
      %p166 = scmp.ne.s32.totalorder %s155, %s156
      %p167 = scmp.eq.s32.totalorder %s31, 0
      %p168 = por %p166, %p167
      %p169 = scmp.ne.s32.totalorder %s155, %s156
      %p170 = scmp.eq.s32.totalorder %s32, 3
      %p171 = por %p169, %p170
      %p173 = scmp.ne.s32.totalorder %s156, %s172
      %p174 = scmp.eq.s32.totalorder %s32, 0
      %p175 = por %p173, %p174
      %s176 = ssub.s32 %s34, %s41
      %p177 = scmp.eq.s32.totalorder %s176, 0
      %s179 = sadd.s32 %s178, 1
      %s180 = scalar_select %p177, %s178, %s179
      %p183 = pneg %p177
      %p184 = scmp.eq.s32.totalorder %s26, 3
      %p185 = por %p183, %p184
      %p186 = scmp.ne.s32.totalorder %s178, %s181
      %p187 = scmp.eq.s32.totalorder %s26, 0
      %p188 = por %p186, %p187
      %p189 = scmp.ne.s32.totalorder %s178, %s181
      %p190 = scmp.eq.s32.totalorder %s31, 3
      %p191 = por %p189, %p190
      %p192 = scmp.ne.s32.totalorder %s181, %s182
      %p193 = scmp.eq.s32.totalorder %s31, 0
      %p194 = por %p192, %p193
      %p195 = scmp.ne.s32.totalorder %s181, %s182
      %p196 = scmp.eq.s32.totalorder %s32, 3
      %p197 = por %p195, %p196
      %p199 = scmp.ne.s32.totalorder %s182, %s198
      %p200 = scmp.eq.s32.totalorder %s32, 0
      %p201 = por %p199, %p200
      %s202 = ssub.s32 %s34, %s41
      %p203 = scmp.eq.s32.totalorder %s202, 0
      %s205 = sadd.s32 %s204, 1
      %s206 = scalar_select %p203, %s204, %s205
      %p209 = pneg %p203
      %p210 = scmp.eq.s32.totalorder %s26, 3
      %p211 = por %p209, %p210
      %p212 = scmp.ne.s32.totalorder %s204, %s207
      %p213 = scmp.eq.s32.totalorder %s26, 0
      %p214 = por %p212, %p213
      %p215 = scmp.ne.s32.totalorder %s204, %s207
      %p216 = scmp.eq.s32.totalorder %s31, 3
      %p217 = por %p215, %p216
      %p218 = scmp.ne.s32.totalorder %s207, %s208
      %p219 = scmp.eq.s32.totalorder %s31, 0
      %p220 = por %p218, %p219
      %p221 = scmp.ne.s32.totalorder %s207, %s208
      %p222 = scmp.eq.s32.totalorder %s32, 3
      %p223 = por %p221, %p222
      %p225 = scmp.ne.s32.totalorder %s208, %s224
      %p226 = scmp.eq.s32.totalorder %s32, 0
      %p227 = por %p225, %p226
      %s228 = ssub.s32 %s34, %s41
      %p229 = scmp.eq.s32.totalorder %s228, 0
      %s231 = sadd.s32 %s230, 1
      %s232 = scalar_select %p229, %s230, %s231
      %p235 = pneg %p229
      %p236 = scmp.eq.s32.totalorder %s26, 3
      %p237 = por %p235, %p236
      %p238 = scmp.ne.s32.totalorder %s230, %s233
      %p239 = scmp.eq.s32.totalorder %s26, 0
      %p240 = por %p238, %p239
      %p241 = scmp.ne.s32.totalorder %s230, %s233
      %p242 = scmp.eq.s32.totalorder %s31, 3
      %p243 = por %p241, %p242
      %p244 = scmp.ne.s32.totalorder %s233, %s234
      %p245 = scmp.eq.s32.totalorder %s31, 0
      %p246 = por %p244, %p245
      %p247 = scmp.ne.s32.totalorder %s233, %s234
      %p248 = scmp.eq.s32.totalorder %s32, 3
      %p249 = por %p247, %p248
      %p251 = scmp.ne.s32.totalorder %s234, %s250
      %p252 = scmp.eq.s32.totalorder %s32, 0
      %p253 = por %p251, %p252
      %s254 = ssub.s32 %s34, %s41
      %p255 = scmp.eq.s32.totalorder %s254, 0
      %s257 = sadd.s32 %s256, 1
      %s258 = scalar_select %p255, %s256, %s257
      %p261 = pneg %p255
      %p262 = scmp.eq.s32.totalorder %s26, 3
      %p263 = por %p261, %p262
      %p264 = scmp.ne.s32.totalorder %s256, %s259
      %p265 = scmp.eq.s32.totalorder %s26, 0
      %p266 = por %p264, %p265
      %p267 = scmp.ne.s32.totalorder %s256, %s259
      %p268 = scmp.eq.s32.totalorder %s31, 3
      %p269 = por %p267, %p268
      %p270 = scmp.ne.s32.totalorder %s259, %s260
      %p271 = scmp.eq.s32.totalorder %s31, 0
      %p272 = por %p270, %p271
      %p273 = scmp.ne.s32.totalorder %s259, %s260
      %p274 = scmp.eq.s32.totalorder %s32, 3
      %p275 = por %p273, %p274
      %p277 = scmp.ne.s32.totalorder %s260, %s276
      %p278 = scmp.eq.s32.totalorder %s32, 0
      %p279 = por %p277, %p278
      %s280 = ssub.s32 %s34, %s41
      %p281 = scmp.eq.s32.totalorder %s280, 0
      %s283 = sadd.s32 %s282, 1
      %s284 = scalar_select %p281, %s282, %s283
      %p287 = pneg %p281
      %p288 = scmp.eq.s32.totalorder %s26, 3
      %p289 = por %p287, %p288
      %p290 = scmp.ne.s32.totalorder %s282, %s285
      %p291 = scmp.eq.s32.totalorder %s26, 0
      %p292 = por %p290, %p291
      %p293 = scmp.ne.s32.totalorder %s282, %s285
      %p294 = scmp.eq.s32.totalorder %s31, 3
      %p295 = por %p293, %p294
      %p296 = scmp.ne.s32.totalorder %s285, %s286
      %p297 = scmp.eq.s32.totalorder %s31, 0
      %p298 = por %p296, %p297
      %p299 = scmp.ne.s32.totalorder %s285, %s286
      %p300 = scmp.eq.s32.totalorder %s32, 3
      %p301 = por %p299, %p300
      %p303 = scmp.ne.s32.totalorder %s286, %s302
      %p304 = scmp.eq.s32.totalorder %s32, 0
      %p305 = por %p303, %p304
      %s306 = ssub.s32 %s34, %s41
      %p307 = scmp.eq.s32.totalorder %s306, 0
      %s309 = sadd.s32 %s308, 1
      %s310 = scalar_select %p307, %s308, %s309
      %p313 = pneg %p307
      %p314 = scmp.eq.s32.totalorder %s26, 3
      %p315 = por %p313, %p314
      %p316 = scmp.ne.s32.totalorder %s308, %s311
      %p317 = scmp.eq.s32.totalorder %s26, 0
      %p318 = por %p316, %p317
      %p319 = scmp.ne.s32.totalorder %s308, %s311
      %p320 = scmp.eq.s32.totalorder %s31, 3
      %p321 = por %p319, %p320
      %p322 = scmp.ne.s32.totalorder %s311, %s312
      %p323 = scmp.eq.s32.totalorder %s31, 0
      %p324 = por %p322, %p323
      %p325 = scmp.ne.s32.totalorder %s311, %s312
      %p326 = scmp.eq.s32.totalorder %s32, 3
      %p327 = por %p325, %p326
      %p329 = scmp.ne.s32.totalorder %s312, %s328
      %p330 = scmp.eq.s32.totalorder %s32, 0
      %p331 = por %p329, %p330
      %s332 = ssub.s32 %s34, %s41
      %p333 = scmp.eq.s32.totalorder %s332, 0
      %s335 = sadd.s32 %s334, 1
      %s336 = scalar_select %p333, %s334, %s335
      %p339 = pneg %p333
      %p340 = scmp.eq.s32.totalorder %s26, 3
      %p341 = por %p339, %p340
      %p342 = scmp.ne.s32.totalorder %s334, %s337
      %p343 = scmp.eq.s32.totalorder %s26, 0
      %p344 = por %p342, %p343
      %p345 = scmp.ne.s32.totalorder %s334, %s337
      %p346 = scmp.eq.s32.totalorder %s31, 3
      %p347 = por %p345, %p346
      %p348 = scmp.ne.s32.totalorder %s337, %s338
      %p349 = scmp.eq.s32.totalorder %s31, 0
      %p350 = por %p348, %p349
      %p351 = scmp.ne.s32.totalorder %s337, %s338
      %p352 = scmp.eq.s32.totalorder %s32, 3
      %p353 = por %p351, %p352
      %p355 = scmp.ne.s32.totalorder %s338, %s354
      %p356 = scmp.eq.s32.totalorder %s32, 0
      %p357 = por %p355, %p356
      %s358 = ssub.s32 %s34, %s41
      %p359 = scmp.eq.s32.totalorder %s358, 0
      %s361 = sadd.s32 %s360, 1
      %s362 = scalar_select %p359, %s360, %s361
      %p365 = pneg %p359
      %p366 = scmp.eq.s32.totalorder %s26, 3
      %p367 = por %p365, %p366
      %p368 = scmp.ne.s32.totalorder %s360, %s363
      %p369 = scmp.eq.s32.totalorder %s26, 0
      %p370 = por %p368, %p369
      %p371 = scmp.ne.s32.totalorder %s360, %s363
      %p372 = scmp.eq.s32.totalorder %s31, 3
      %p373 = por %p371, %p372
      %p374 = scmp.ne.s32.totalorder %s363, %s364
      %p375 = scmp.eq.s32.totalorder %s31, 0
      %p376 = por %p374, %p375
      %p377 = scmp.ne.s32.totalorder %s363, %s364
      %p378 = scmp.eq.s32.totalorder %s32, 3
      %p379 = por %p377, %p378
      %p381 = scmp.ne.s32.totalorder %s364, %s380
      %p382 = scmp.eq.s32.totalorder %s32, 0
      %p383 = por %p381, %p382
      %s385 = sadd.s32 %s384, 1
      %p388 = scmp.eq.s32.totalorder %s26, 3
      %p389 = scmp.ne.s32.totalorder %s384, %s386
      %p390 = scmp.eq.s32.totalorder %s26, 0
      %p391 = por %p389, %p390
      %p392 = scmp.ne.s32.totalorder %s384, %s386
      %p393 = scmp.eq.s32.totalorder %s31, 3
      %p394 = por %p392, %p393
      %p395 = scmp.ne.s32.totalorder %s386, %s387
      %p396 = scmp.eq.s32.totalorder %s31, 0
      %p397 = por %p395, %p396
      %p398 = scmp.ne.s32.totalorder %s386, %s387
      %p399 = scmp.eq.s32.totalorder %s32, 3
      %p400 = por %p398, %p399
      %p402 = scmp.ne.s32.totalorder %s387, %s401
      %p403 = scmp.eq.s32.totalorder %s32, 0
      %p404 = por %p402, %p403
      %s406 = sadd.s32 %s405, 1
      %p409 = scmp.eq.s32.totalorder %s26, 3
      %p410 = scmp.ne.s32.totalorder %s405, %s407
      %p411 = scmp.eq.s32.totalorder %s26, 0
      %p412 = por %p410, %p411
      %p413 = scmp.ne.s32.totalorder %s405, %s407
      %p414 = scmp.eq.s32.totalorder %s31, 3
      %p415 = por %p413, %p414
      %p416 = scmp.ne.s32.totalorder %s407, %s408
      %p417 = scmp.eq.s32.totalorder %s31, 0
      %p418 = por %p416, %p417
      %p419 = scmp.ne.s32.totalorder %s407, %s408
      %p420 = scmp.eq.s32.totalorder %s32, 3
      %p421 = por %p419, %p420
      %p423 = scmp.ne.s32.totalorder %s408, %s422
      %p424 = scmp.eq.s32.totalorder %s32, 0
      %p425 = por %p423, %p424
      %s427 = sadd.s32 %s426, 1
      %p430 = scmp.eq.s32.totalorder %s26, 3
      %p431 = scmp.ne.s32.totalorder %s426, %s428
      %p432 = scmp.eq.s32.totalorder %s26, 0
      %p433 = por %p431, %p432
      %p434 = scmp.ne.s32.totalorder %s426, %s428
      %p435 = scmp.eq.s32.totalorder %s31, 3
      %p436 = por %p434, %p435
      %p437 = scmp.ne.s32.totalorder %s428, %s429
      %p438 = scmp.eq.s32.totalorder %s31, 0
      %p439 = por %p437, %p438
      %p440 = scmp.ne.s32.totalorder %s428, %s429
      %p441 = scmp.eq.s32.totalorder %s32, 3
      %p442 = por %p440, %p441
      %p444 = scmp.ne.s32.totalorder %s429, %s443
      %p445 = scmp.eq.s32.totalorder %s32, 0
      %p446 = por %p444, %p445
      %s448 = sadd.s32 %s447, 1
      %p451 = scmp.eq.s32.totalorder %s26, 3
      %p452 = scmp.ne.s32.totalorder %s447, %s449
      %p453 = scmp.eq.s32.totalorder %s26, 0
      %p454 = por %p452, %p453
      %p455 = scmp.ne.s32.totalorder %s447, %s449
      %p456 = scmp.eq.s32.totalorder %s31, 3
      %p457 = por %p455, %p456
      %p458 = scmp.ne.s32.totalorder %s449, %s450
      %p459 = scmp.eq.s32.totalorder %s31, 0
      %p460 = por %p458, %p459
      %p461 = scmp.ne.s32.totalorder %s449, %s450
      %p462 = scmp.eq.s32.totalorder %s32, 3
      %p463 = por %p461, %p462
      %p465 = scmp.ne.s32.totalorder %s450, %s464
      %p466 = scmp.eq.s32.totalorder %s32, 0
      %p467 = por %p465, %p466
      %s468 = ssub.s32 %s33, %s45
      %p469 = scmp.eq.s32.totalorder %s468, 0
      %s471 = sadd.s32 %s470, 1
      %s472 = scalar_select %p469, %s470, %s471
      %p475 = pneg %p469
      %p476 = scmp.eq.s32.totalorder %s26, 3
      %p477 = por %p475, %p476
      %p478 = scmp.ne.s32.totalorder %s470, %s473
      %p479 = scmp.eq.s32.totalorder %s26, 0
      %p480 = por %p478, %p479
      %p481 = scmp.ne.s32.totalorder %s470, %s473
      %p482 = scmp.eq.s32.totalorder %s31, 3
      %p483 = por %p481, %p482
      %p484 = scmp.ne.s32.totalorder %s473, %s474
      %p485 = scmp.eq.s32.totalorder %s31, 0
      %p486 = por %p484, %p485
      %p487 = scmp.ne.s32.totalorder %s473, %s474
      %p488 = scmp.eq.s32.totalorder %s32, 3
      %p489 = por %p487, %p488
      %p491 = scmp.ne.s32.totalorder %s474, %s490
      %p492 = scmp.eq.s32.totalorder %s32, 0
      %p493 = por %p491, %p492
      %p494 = scmp.le.s32.totalorder 1, %s26
      %p495 = scmp.lt.s32.totalorder %s26, 5
      %p496 = pnand %p494, %p495
      %p497 = pneg %p496
      // Predicated region
      $region9: #{vit_forward.3} parent=5 // pred_check
        _
      $region10: #{vit_forward.3} parent=5 // pred_check_branch
        %499 = sbr.rel (%p496) target = $region12
      $region11: #{vit_forward.3} parent=5 // pred_region
        %s500 = ssub.s32 %s26, 1
        // Predicated region
        $region13: #{vit_forward.3} parent=11 // pred_check
          %p501 = pneg %p397
        $region14: #{vit_forward.3} parent=11 // pred_check_branch
          %503 = sbr.rel (%p501) target = $region16
        $region15: #{vit_forward.3} parent=11 // pred_region
          _
        $region16: #{vit_forward.3} parent=11 // pred_fallthru
          _
        // Predicated region
        $region17: #{vit_forward.3} parent=11 // pred_check
          %p504 = pneg %p418
        $region18: #{vit_forward.3} parent=11 // pred_check_branch
          %506 = sbr.rel (%p504) target = $region20
        $region19: #{vit_forward.3} parent=11 // pred_region
          _
        $region20: #{vit_forward.3} parent=11 // pred_fallthru
          _
        // Predicated region
        $region21: #{vit_forward.3} parent=11 // pred_check
          %p507 = pneg %p439
        $region22: #{vit_forward.3} parent=11 // pred_check_branch
          %509 = sbr.rel (%p507) target = $region24
        $region23: #{vit_forward.3} parent=11 // pred_region
          _
        $region24: #{vit_forward.3} parent=11 // pred_fallthru
          _
        // Predicated region
        $region25: #{vit_forward.3} parent=11 // pred_check
          %p510 = pneg %p460
        $region26: #{vit_forward.3} parent=11 // pred_check_branch
          %512 = sbr.rel (%p510) target = $region28
        $region27: #{vit_forward.3} parent=11 // pred_region
          _
        $region28: #{vit_forward.3} parent=11 // pred_fallthru
          _
      $region12: #{vit_forward.3} parent=5 // pred_fallthru
        _
      %p513 = scmp.lt.s32.totalorder %s26, 4
      // Predicated region
      $region29: #{vit_forward.3} parent=5 // pred_check
        %p514 = pneg %p513
      $region30: #{vit_forward.3} parent=5 // pred_check_branch
        %516 = sbr.rel (%p514) target = $region32
      $region31: #{vit_forward.3} parent=5 // pred_region
        // Predicated region
        $region33: #{vit_forward.3} parent=31 // pred_check
          %p517 = pneg %p58
        $region34: #{vit_forward.3} parent=31 // pred_check_branch
          %519 = sbr.rel (%p517) target = $region36
        $region35: #{vit_forward.3} parent=31 // pred_region
          %p520 = scmp.lt.s32.totalorder %s33, 1
          %s521 = scalar_select %p520, %s33, 1
          %s522 = smul.addr %s521, 3
          %s523 = smul.addr %s522, 8
          %s524 = scalar_lea.vmem %s0, %s523
        $region36: #{vit_forward.3} parent=31 // pred_fallthru
          _
        // Predicated region
        $region37: #{vit_forward.3} parent=31 // pred_check
          %p525 = pneg %p84
        $region38: #{vit_forward.3} parent=31 // pred_check_branch
          %527 = sbr.rel (%p525) target = $region40
        $region39: #{vit_forward.3} parent=31 // pred_region
          %p528 = scmp.lt.s32.totalorder %s34, 1
          %s529 = scalar_select %p528, %s34, 1
          %s530 = scalar_lea.vmem %s1, %s529
        $region40: #{vit_forward.3} parent=31 // pred_fallthru
          _
        // Predicated region
        $region41: #{vit_forward.3} parent=31 // pred_check
          %p531 = pneg %p110
        $region42: #{vit_forward.3} parent=31 // pred_check_branch
          %533 = sbr.rel (%p531) target = $region44
        $region43: #{vit_forward.3} parent=31 // pred_region
          %p534 = scmp.lt.s32.totalorder %s34, 1
          %s535 = scalar_select %p534, %s34, 1
          %s536 = scalar_lea.vmem %s2, %s535
        $region44: #{vit_forward.3} parent=31 // pred_fallthru
          _
        // Predicated region
        $region45: #{vit_forward.3} parent=31 // pred_check
          %p537 = pneg %p136
        $region46: #{vit_forward.3} parent=31 // pred_check_branch
          %539 = sbr.rel (%p537) target = $region48
        $region47: #{vit_forward.3} parent=31 // pred_region
          %p540 = scmp.lt.s32.totalorder %s34, 1
          %s541 = scalar_select %p540, %s34, 1
          %s542 = smul.addr %s541, 4
          %s543 = smul.addr %s542, 4
          %s544 = scalar_lea.vmem %s3, %s543
        $region48: #{vit_forward.3} parent=31 // pred_fallthru
          _
        // Predicated region
        $region49: #{vit_forward.3} parent=31 // pred_check
          %p545 = pneg %p162
        $region50: #{vit_forward.3} parent=31 // pred_check_branch
          %547 = sbr.rel (%p545) target = $region52
        $region51: #{vit_forward.3} parent=31 // pred_region
          %p548 = scmp.lt.s32.totalorder %s34, 1
          %s549 = scalar_select %p548, %s34, 1
          %s550 = scalar_lea.vmem %s4, %s549
        $region52: #{vit_forward.3} parent=31 // pred_fallthru
          _
        // Predicated region
        $region53: #{vit_forward.3} parent=31 // pred_check
          %p551 = pneg %p188
        $region54: #{vit_forward.3} parent=31 // pred_check_branch
          %553 = sbr.rel (%p551) target = $region56
        $region55: #{vit_forward.3} parent=31 // pred_region
          %p554 = scmp.lt.s32.totalorder %s34, 1
          %s555 = scalar_select %p554, %s34, 1
          %s556 = smul.addr %s555, 4
          %s557 = smul.addr %s556, 4
          %s558 = scalar_lea.vmem %s5, %s557
        $region56: #{vit_forward.3} parent=31 // pred_fallthru
          _
        // Predicated region
        $region57: #{vit_forward.3} parent=31 // pred_check
          %p559 = pneg %p214
        $region58: #{vit_forward.3} parent=31 // pred_check_branch
          %561 = sbr.rel (%p559) target = $region60
        $region59: #{vit_forward.3} parent=31 // pred_region
          %p562 = scmp.lt.s32.totalorder %s34, 1
          %s563 = scalar_select %p562, %s34, 1
          %s564 = scalar_lea.vmem %s6, %s563
        $region60: #{vit_forward.3} parent=31 // pred_fallthru
          _
        // Predicated region
        $region61: #{vit_forward.3} parent=31 // pred_check
          %p565 = pneg %p240
        $region62: #{vit_forward.3} parent=31 // pred_check_branch
          %567 = sbr.rel (%p565) target = $region64
        $region63: #{vit_forward.3} parent=31 // pred_region
          %p568 = scmp.lt.s32.totalorder %s34, 1
          %s569 = scalar_select %p568, %s34, 1
          %s570 = scalar_lea.vmem %s7, %s569
        $region64: #{vit_forward.3} parent=31 // pred_fallthru
          _
        // Predicated region
        $region65: #{vit_forward.3} parent=31 // pred_check
          %p571 = pneg %p266
        $region66: #{vit_forward.3} parent=31 // pred_check_branch
          %573 = sbr.rel (%p571) target = $region68
        $region67: #{vit_forward.3} parent=31 // pred_region
          %p574 = scmp.lt.s32.totalorder %s34, 1
          %s575 = scalar_select %p574, %s34, 1
          %s576 = scalar_lea.vmem %s8, %s575
        $region68: #{vit_forward.3} parent=31 // pred_fallthru
          _
        // Predicated region
        $region69: #{vit_forward.3} parent=31 // pred_check
          %p577 = pneg %p292
        $region70: #{vit_forward.3} parent=31 // pred_check_branch
          %579 = sbr.rel (%p577) target = $region72
        $region71: #{vit_forward.3} parent=31 // pred_region
          %p580 = scmp.lt.s32.totalorder %s34, 1
          %s581 = scalar_select %p580, %s34, 1
          %s582 = smul.addr %s581, 4
          %s583 = smul.addr %s582, 4
          %s584 = scalar_lea.vmem %s9, %s583
        $region72: #{vit_forward.3} parent=31 // pred_fallthru
          _
        // Predicated region
        $region73: #{vit_forward.3} parent=31 // pred_check
          %p585 = pneg %p318
        $region74: #{vit_forward.3} parent=31 // pred_check_branch
          %587 = sbr.rel (%p585) target = $region76
        $region75: #{vit_forward.3} parent=31 // pred_region
          %p588 = scmp.lt.s32.totalorder %s34, 1
          %s589 = scalar_select %p588, %s34, 1
          %s590 = scalar_lea.vmem %s10, %s589
        $region76: #{vit_forward.3} parent=31 // pred_fallthru
          _
        // Predicated region
        $region77: #{vit_forward.3} parent=31 // pred_check
          %p591 = pneg %p344
        $region78: #{vit_forward.3} parent=31 // pred_check_branch
          %593 = sbr.rel (%p591) target = $region80
        $region79: #{vit_forward.3} parent=31 // pred_region
          %p594 = scmp.lt.s32.totalorder %s34, 1
          %s595 = scalar_select %p594, %s34, 1
          %s596 = smul.addr %s595, 8
          %s597 = smul.addr %s596, 4
          %s598 = scalar_lea.vmem %s11, %s597
        $region80: #{vit_forward.3} parent=31 // pred_fallthru
          _
        // Predicated region
        $region81: #{vit_forward.3} parent=31 // pred_check
          %p599 = pneg %p370
        $region82: #{vit_forward.3} parent=31 // pred_check_branch
          %601 = sbr.rel (%p599) target = $region84
        $region83: #{vit_forward.3} parent=31 // pred_region
          %p602 = scmp.lt.s32.totalorder %s34, 1
          %s603 = scalar_select %p602, %s34, 1
          %s604 = scalar_lea.vmem %s12, %s603
        $region84: #{vit_forward.3} parent=31 // pred_fallthru
          _
      $region32: #{vit_forward.3} parent=5 // pred_fallthru
        _
      %p605 = scmp.le.s32.totalorder 1, %s26
      %p606 = scmp.lt.s32.totalorder %s26, 5
      %p607 = pnand %p605, %p606
      %p608 = pneg %p607
      // Predicated region
      $region85: #{vit_forward.3} parent=5 // pred_check
        _
      $region86: #{vit_forward.3} parent=5 // pred_check_branch
        %610 = sbr.rel (%p607) target = $region88
      $region87: #{vit_forward.3} parent=5 // pred_region
        %s611 = ssub.s32 %s26, 1
        %p612 = scmp.lt.s32.totalorder %s35, 1
        %s613 = scalar_select %p612, %s35, 1
        %s614 = smul.addr %s613, 3
        %s615 = smul.addr %s614, 8
        %s616 = scalar_lea.vmem %s0, %s615
        %p617 = pneg %p64
        %p618 = pneg %p61
        %p619 = scmp.lt.s32.totalorder %s36, 1
        %s620 = scalar_select %p619, %s36, 1
        %s621 = scalar_lea.vmem %s1, %s620
        %p622 = pneg %p90
        %p623 = pneg %p87
        %p624 = scmp.lt.s32.totalorder %s36, 1
        %s625 = scalar_select %p624, %s36, 1
        %s626 = scalar_lea.vmem %s2, %s625
        %p627 = pneg %p116
        %p628 = pneg %p113
        %p629 = scmp.lt.s32.totalorder %s36, 1
        %s630 = scalar_select %p629, %s36, 1
        %s631 = smul.addr %s630, 4
        %s632 = smul.addr %s631, 4
        %s633 = scalar_lea.vmem %s3, %s632
        %p634 = pneg %p142
        %p635 = pneg %p139
        %p636 = scmp.lt.s32.totalorder %s36, 1
        %s637 = scalar_select %p636, %s36, 1
        %s638 = scalar_lea.vmem %s4, %s637
        %p639 = pneg %p168
        %p640 = pneg %p165
        %p641 = scmp.lt.s32.totalorder %s36, 1
        %s642 = scalar_select %p641, %s36, 1
        %s643 = smul.addr %s642, 4
        %s644 = smul.addr %s643, 4
        %s645 = scalar_lea.vmem %s5, %s644
        %p646 = pneg %p194
        %p647 = pneg %p191
        %p648 = scmp.lt.s32.totalorder %s36, 1
        %s649 = scalar_select %p648, %s36, 1
        %s650 = scalar_lea.vmem %s6, %s649
        %p651 = pneg %p220
        %p652 = pneg %p217
        %p653 = scmp.lt.s32.totalorder %s36, 1
        %s654 = scalar_select %p653, %s36, 1
        %s655 = scalar_lea.vmem %s7, %s654
        %p656 = pneg %p246
        %p657 = pneg %p243
        %p658 = scmp.lt.s32.totalorder %s36, 1
        %s659 = scalar_select %p658, %s36, 1
        %s660 = scalar_lea.vmem %s8, %s659
        %p661 = pneg %p272
        %p662 = pneg %p269
        %p663 = scmp.lt.s32.totalorder %s36, 1
        %s664 = scalar_select %p663, %s36, 1
        %s665 = smul.addr %s664, 4
        %s666 = smul.addr %s665, 4
        %s667 = scalar_lea.vmem %s9, %s666
        %p668 = pneg %p298
        %p669 = pneg %p295
        %p670 = scmp.lt.s32.totalorder %s36, 1
        %s671 = scalar_select %p670, %s36, 1
        %s672 = scalar_lea.vmem %s10, %s671
        %p673 = pneg %p324
        %p674 = pneg %p321
        %p675 = scmp.lt.s32.totalorder %s36, 1
        %s676 = scalar_select %p675, %s36, 1
        %s677 = smul.addr %s676, 8
        %s678 = smul.addr %s677, 4
        %s679 = scalar_lea.vmem %s11, %s678
        %p680 = pneg %p350
        %p681 = pneg %p347
        %p682 = scmp.lt.s32.totalorder %s36, 1
        %s683 = scalar_select %p682, %s36, 1
        %s684 = scalar_lea.vmem %s12, %s683
        %p685 = pneg %p376
        %p686 = pneg %p373
        %p687 = pneg %p397
        %p688 = pneg %p394
        %p689 = pneg %p418
        %p690 = pneg %p415
        %p691 = pneg %p439
        %p692 = pneg %p436
        %p693 = pneg %p460
        %p694 = pneg %p457
        %p695 = pneg %p486
        %p696 = pneg %p483
        %s697 = sand.u32 %s473, 1
        %s698 = scalar_lea.sflag [#allocation4], %s697
        %s699 = sand.u32 %s473, 1
        %s700 = scalar_lea.vmem [#allocation3], %s699
        %p701 = scmp.lt.s32.totalorder %s35, 1
        %s702 = scalar_select %p701, %s35, 1
        %s703 = smul.addr %s702, 3
        %s704 = smul.addr %s703, 8
        %s705 = scalar_lea.vmem %s0, %s704
        %p706 = scmp.lt.s32.totalorder %s36, 1
        %s707 = scalar_select %p706, %s36, 1
        %s708 = scalar_lea.vmem %s1, %s707
        %p709 = scmp.lt.s32.totalorder %s36, 1
        %s710 = scalar_select %p709, %s36, 1
        %s711 = scalar_lea.vmem %s2, %s710
        %p712 = scmp.lt.s32.totalorder %s36, 1
        %s713 = scalar_select %p712, %s36, 1
        %s714 = smul.addr %s713, 4
        %s715 = smul.addr %s714, 4
        %s716 = scalar_lea.vmem %s3, %s715
        %p717 = scmp.lt.s32.totalorder %s36, 1
        %s718 = scalar_select %p717, %s36, 1
        %s719 = scalar_lea.vmem %s4, %s718
        %p720 = scmp.lt.s32.totalorder %s36, 1
        %s721 = scalar_select %p720, %s36, 1
        %s722 = smul.addr %s721, 4
        %s723 = smul.addr %s722, 4
        %s724 = scalar_lea.vmem %s5, %s723
        %p725 = scmp.lt.s32.totalorder %s36, 1
        %s726 = scalar_select %p725, %s36, 1
        %s727 = scalar_lea.vmem %s6, %s726
        %p728 = scmp.lt.s32.totalorder %s36, 1
        %s729 = scalar_select %p728, %s36, 1
        %s730 = scalar_lea.vmem %s7, %s729
        %p731 = scmp.lt.s32.totalorder %s36, 1
        %s732 = scalar_select %p731, %s36, 1
        %s733 = scalar_lea.vmem %s8, %s732
        %p734 = scmp.lt.s32.totalorder %s36, 1
        %s735 = scalar_select %p734, %s36, 1
        %s736 = smul.addr %s735, 4
        %s737 = smul.addr %s736, 4
        %s738 = scalar_lea.vmem %s9, %s737
        %p739 = scmp.lt.s32.totalorder %s36, 1
        %s740 = scalar_select %p739, %s36, 1
        %s741 = scalar_lea.vmem %s10, %s740
        %p742 = scmp.lt.s32.totalorder %s36, 1
        %s743 = scalar_select %p742, %s36, 1
        %s744 = smul.addr %s743, 8
        %s745 = smul.addr %s744, 4
        %s746 = scalar_lea.vmem %s11, %s745
        %p747 = scmp.lt.s32.totalorder %s36, 1
        %s748 = scalar_select %p747, %s36, 1
        %s749 = scalar_lea.vmem %s12, %s748
        %p751 = scmp.eq.s32.totalorder %s36, 0
        // Predicated region
        $region89: #{vit_forward.3} parent=87 // pred_check
          %p752 = pneg %p751
        $region90: #{vit_forward.3} parent=87 // pred_check_branch
          %754 = sbr.rel (%p752) target = $region92
        $region91: #{vit_forward.3} parent=87 // pred_region
          %v755 = vld [vmem:[%s705] sm:$0xff]
          %v756 = vld [vmem:[%s705 + $0x8] sm:$0xff]
          %v757 = vld [vmem:[%s705 + $0x10] sm:$0x1]
          %vm758 = vcmask 261120
          %759 = vst.msk [vmem:[#allocation2] sm:$0xff] %vm758, %v755
          %760 = vst.msk [vmem:[#allocation2 + $0x8] sm:$0xff] %vm758, %v756
          %vm761 = vcmask 253952
          %762 = vst.msk [vmem:[#allocation2 + $0x10] sm:$0x1] %vm761, %v757
        $region92: #{vit_forward.3} parent=87 // pred_fallthru
          _
        %v763 = vld [vmem:[#allocation2] sm:$0xff]
        %v764 = vld [vmem:[#allocation2 + $0x8] sm:$0xff]
        %v765 = vld [vmem:[#allocation2 + $0x10] sm:$0x1]
        %v766 = vld [vmem:[%s708] sm:$0x1]
        %v767 = vld [vmem:[%s711] sm:$0x1]
        %vm768 = vcmask 261120
        %v769 = vsel %vm768, %v763, 0.0
        %770 = vadd.xlane.f32.xlu0 %v769
        %v771 = vpop.xlane.xlu0 %770
        %v772 = vsel %vm768, %v764, 0.0
        %773 = vadd.xlane.f32.xlu0 %v772
        %v774 = vpop.xlane.xlu0 %773
        %vm775 = vcmask 253952
        %v776 = vsel %vm775, %v765, 0.0
        %777 = vadd.xlane.f32.xlu0 %v776
        %v778 = vpop.xlane.xlu0 %777
        %v779 = vrcp.pop 32.0
        %v780 = vmul.f32 %v771, %v779
        %v781 = vmul.f32 %v774, %v779
        %v782 = vmul.f32 %v778, %v779
        %v783 = vsub.f32 %v763, %v780
        %v784 = vsub.f32 %v764, %v781
        %v785 = vsub.f32 %v765, %v782
        %v786 = vmul.f32 %v783, %v783
        %v787 = vmul.f32 %v784, %v784
        %v788 = vmul.f32 %v785, %v785
        %v789 = vsel %vm768, %v786, 0.0
        %790 = vadd.xlane.f32.xlu0 %v789
        %v791 = vpop.xlane.xlu0 %790
        %v792 = vsel %vm768, %v787, 0.0
        %793 = vadd.xlane.f32.xlu0 %v792
        %v794 = vpop.xlane.xlu0 %793
        %v795 = vsel %vm775, %v788, 0.0
        %796 = vadd.xlane.f32.xlu0 %v795
        %v797 = vpop.xlane.xlu0 %796
        %v798 = vmul.f32 %v791, %v779
        %v799 = vmul.f32 %v794, %v779
        %v800 = vmul.f32 %v797, %v779
        %v801 = vadd.f32 %v798, 1e-05
        %v802 = vadd.f32 %v799, 1e-05
        %v803 = vadd.f32 %v800, 1e-05
        %v804 = vrsqrt.pop %v801
        %v805 = vrsqrt.pop %v802
        %v806 = vrsqrt.pop %v803
        %v807 = vmul.f32 %v783, %v804
        %v808 = vmul.f32 %v784, %v805
        %v809 = vmul.f32 %v785, %v806
        %v811 = vlaneseq
        %v812 = vshrl.u32 %v811, 7
        %v813 = vsub.s32 0, %v812
        %v814 = vrot.slane %v766, %v813
        %v816 = vmul.f32 %v807, %v814
        %v817 = vmul.f32 %v808, %v814
        %v818 = vmul.f32 %v809, %v814
        %v820 = vlaneseq
        %v821 = vshrl.u32 %v820, 7
        %v822 = vsub.s32 0, %v821
        %v823 = vrot.slane %v767, %v822
        %v825 = vadd.f32 %v816, %v823
        %v826 = vadd.f32 %v817, %v823
        %v827 = vadd.f32 %v818, %v823
        %v828 = vpack.c.bf16 %v826, %v825
        %v829 = vpack.c.bf16 %v827, %v827
        %v830 = vld [vmem:[%s716] sm:$0xf]
        %v831 = vld [vmem:[%s716 + $0x4] sm:$0xf]
        %v832 = vld [vmem:[%s716 + $0x8] sm:$0xf]
        %v833 = vld [vmem:[%s716 + $0xc] sm:$0xf]
        %v834 = vld [vmem:[%s719] sm:$0x1]
        %v836 = vlaneseq
        %v837 = vshrl.u32 %v836, 7
        %v838 = vsub.s32 0, %v837
        %v839 = vrot.slane %v834, %v838
        %v845 = vunpack.c.l.b16 %v830
        %v846 = vunpack.c.l.b16 %v831
        %v847 = vunpack.c.l.b16 %v832
        %v848 = vunpack.c.l.b16 %v833
        %v849 = vpack.c.b16 %v846, %v845
        %v850 = vpack.c.b16 %v848, %v847
        %v854 = vsel %vm768, %v828, 0
        %v857 = vsel %vm768, %v829, 0
        %859 = vmatprep.subr.bf16.mxu0 0
        %860 = vmatpush1.bf16.msra.mxu0 %v849
        %861 = vmatprep.subr.bf16.mxu0 0
        %862 = vmatpush1.bf16.msra.mxu0 %v850
        %863 = vmatprep.subr.bf16.mxu0 0
        %864 = vmatpush1.bf16.msra.mxu0 0
        %865 = vmatprep.subr.bf16.mxu0 0
        %866 = vmatpush1.bf16.msra.mxu0 0
        %867 = vmatprep.subr.bf16.mxu0 0
        %868 = vmatpush1.bf16.msra.mxu0 0
        %869 = vmatprep.subr.bf16.mxu0 0
        %870 = vmatpush1.bf16.msra.mxu0 0
        %871 = vmatprep.subr.bf16.mxu0 0
        %872 = vmatpush1.bf16.msra.mxu0 0
        %873 = vmatprep.subr.bf16.mxu0 0
        %874 = vmatpush1.bf16.msra.mxu0 0
        %875 = vmatprep.subr.bf16.mxu0 0
        %876 = vmatpush1.bf16.msra.mxu0 0
        %877 = vmatprep.subr.bf16.mxu0 0
        %878 = vmatpush1.bf16.msra.mxu0 0
        %879 = vmatprep.subr.bf16.mxu0 0
        %880 = vmatpush1.bf16.msra.mxu0 0
        %881 = vmatprep.subr.bf16.mxu0 0
        %882 = vmatpush1.bf16.msra.mxu0 0
        %883 = vmatprep.subr.bf16.mxu0 0
        %884 = vmatpush1.bf16.msra.mxu0 0
        %885 = vmatprep.subr.bf16.mxu0 0
        %886 = vmatpush1.bf16.msra.mxu0 0
        %887 = vmatprep.subr.bf16.mxu0 0
        %888 = vmatpush1.bf16.msra.mxu0 0
        %889 = vmatprep.subr.bf16.mxu0 0
        %890 = vmatpush1.bf16.msra.mxu0 0
        %891 = vmatprep.mubr.bf16.mxu0 0
        %892 = vmatmul.mubr.bf16.gmra.mrb[0].mxu0 %v854
        %v893 = vpop.f32.mrb[0].mxu0
        %v894 = vadd.f32 %v839, %v893
        %v895 = vpop.f32.mrb[0].mxu0
        %v896 = vpop.f32.mrb[0].mxu0
        %v897 = vadd.f32 %v839, %v896
        %v898 = vpop.f32.mrb[0].mxu0
        %899 = vmatprep.mubr.bf16.mxu0 0
        %900 = vmatmul.mubr.bf16.gmra.mrb[0].mxu0 %v857
        %v901 = vpop.f32.mrb[0].mxu0
        %v902 = vadd.f32 %v839, %v901
        %v903 = vpop.f32.mrb[0].mxu0
        %v904 = vpop.f32.mrb[0].mxu0
        %v905 = vpop.f32.mrb[0].mxu0
        %906 = vdwg.mxu0
        %v907 = vmul.f32 %v894, 0.35355338
        %v908 = vmul.f32 %v897, 0.35355338
        %v909 = vmul.f32 %v902, 0.35355338
        %v910 = vpack.c.bf16 %v908, %v907
        %v911 = vpack.c.bf16 %v909, %v909
        %v912 = vpack.c.bf16 %v897, %v894
        %v913 = vpack.c.bf16 %v902, %v902
        %916 = vrot.lane.b32.xlu0 %v912, 96
        %v917 = vpop.permute.xlu0 %916
        %918 = vrot.lane.b32.xlu0 %v913, 96
        %v919 = vpop.permute.xlu0 %918
        %vm920 = vcmask 64512
        %v922 = vsel %vm920, %v910, 0
        %v925 = vsel %vm920, %v911, 0
        %v928 = vsel %vm920, %v917, 0
        %v931 = vsel %vm920, %v919, 0
        %933 = vmatprep.subr.bf16.mxu0 0
        %934 = vmatpush1.bf16.xpose.msra.mxu0 %v928
        %935 = vmatprep.subr.bf16.mxu0 0
        %936 = vmatpush1.bf16.xpose.msra.mxu0 %v931
        %937 = vmatprep.subr.bf16.mxu0 0
        %938 = vmatpush1.bf16.xpose.msra.mxu0 0
        %939 = vmatprep.subr.bf16.mxu0 0
        %940 = vmatpush1.bf16.xpose.msra.mxu0 0
        %941 = vmatprep.subr.bf16.mxu0 0
        %942 = vmatpush1.bf16.xpose.msra.mxu0 0
        %943 = vmatprep.subr.bf16.mxu0 0
        %944 = vmatpush1.bf16.xpose.msra.mxu0 0
        %945 = vmatprep.subr.bf16.mxu0 0
        %946 = vmatpush1.bf16.xpose.msra.mxu0 0
        %947 = vmatprep.subr.bf16.mxu0 0
        %948 = vmatpush1.bf16.xpose.msra.mxu0 0
        %949 = vmatprep.subr.bf16.mxu0 0
        %950 = vmatpush1.bf16.xpose.msra.mxu0 0
        %951 = vmatprep.subr.bf16.mxu0 0
        %952 = vmatpush1.bf16.xpose.msra.mxu0 0
        %953 = vmatprep.subr.bf16.mxu0 0
        %954 = vmatpush1.bf16.xpose.msra.mxu0 0
        %955 = vmatprep.subr.bf16.mxu0 0
        %956 = vmatpush1.bf16.xpose.msra.mxu0 0
        %957 = vmatprep.subr.bf16.mxu0 0
        %958 = vmatpush1.bf16.xpose.msra.mxu0 0
        %959 = vmatprep.subr.bf16.mxu0 0
        %960 = vmatpush1.bf16.xpose.msra.mxu0 0
        %961 = vmatprep.subr.bf16.mxu0 0
        %962 = vmatpush1.bf16.xpose.msra.mxu0 0
        %963 = vmatprep.subr.bf16.mxu0 0
        %964 = vmatpush1.bf16.xpose.msra.mxu0 0
        %965 = vmatprep.mubr.bf16.mxu0 0
        %966 = vmatmul.mubr.bf16.gmra.mrb[0].mxu0 %v922
        %v967 = vpop.f32.mrb[0].mxu0
        %v968 = vadd.f32 0.0, %v967
        %v969 = vpop.f32.mrb[0].mxu0
        %v970 = vpop.f32.mrb[0].mxu0
        %v971 = vadd.f32 0.0, %v970
        %v972 = vpop.f32.mrb[0].mxu0
        %973 = vmatprep.mubr.bf16.mxu0 0
        %974 = vmatmul.mubr.bf16.gmra.mrb[0].mxu0 %v925
        %v975 = vpop.f32.mrb[0].mxu0
        %v976 = vadd.f32 0.0, %v975
        %v977 = vpop.f32.mrb[0].mxu0
        %v978 = vpop.f32.mrb[0].mxu0
        %v979 = vpop.f32.mrb[0].mxu0
        %980 = vdwg.mxu0
        %vm981 = vcmask 138240
        %v982 = vsel %vm981, %v968, -inf
        %983 = vmax.xlane.f32.xlu0 %v982
        %v984 = vpop.xlane.xlu0 %983
        %v985 = vsel %vm981, %v971, -inf
        %986 = vmax.xlane.f32.xlu0 %v985
        %v987 = vpop.xlane.xlu0 %986
        %vm988 = vcmask 131072
        %v989 = vsel %vm988, %v976, -inf
        %990 = vmax.xlane.f32.xlu0 %v989
        %v991 = vpop.xlane.xlu0 %990
        %v992 = vsub.f32 %v968, %v984
        %v993 = vsub.f32 %v971, %v987
        %v994 = vsub.f32 %v976, %v991
        %v995 = vmul.f32 %v992, 1.442695
        %v996 = vpow.pop %v995
        %v997 = vmul.f32 %v993, 1.442695
        %v998 = vpow.pop %v997
        %v999 = vmul.f32 %v994, 1.442695
        %v1000 = vpow.pop %v999
        %v1001 = vsel %vm981, %v996, 0.0
        %1002 = vadd.xlane.f32.xlu0 %v1001
        %v1003 = vpop.xlane.xlu0 %1002
        %v1004 = vsel %vm981, %v998, 0.0
        %1005 = vadd.xlane.f32.xlu0 %v1004
        %v1006 = vpop.xlane.xlu0 %1005
        %v1007 = vsel %vm988, %v1000, 0.0
        %1008 = vadd.xlane.f32.xlu0 %v1007
        %v1009 = vpop.xlane.xlu0 %1008
        %v1010 = vrcp.pop %v1003
        %v1011 = vrcp.pop %v1006
        %v1012 = vrcp.pop %v1009
        %v1013 = vmul.f32 %v996, %v1010
        %v1014 = vmul.f32 %v998, %v1011
        %v1015 = vmul.f32 %v1000, %v1012
        %v1016 = vpack.c.bf16 %v1014, %v1013
        %v1017 = vpack.c.bf16 %v1015, %v1015
        %1018 = vrot.lane.b32.xlu0 %v912, 64
        %v1019 = vpop.permute.xlu0 %1018
        %1020 = vrot.lane.b32.xlu0 %v913, 64
        %v1021 = vpop.permute.xlu0 %1020
        %v1024 = vsel %vm981, %v1016, 0
        %v1027 = vsel %vm981, %v1017, 0
        %vm1029 = vcmask 1040384
        %v1030 = vsel 0, 4294967295, 65535
        %v1031 = vsel %vm1029, %v1030, 0
        %v1033 = vand.u32 %v1021, %v1031
        %1035 = vmatprep.subr.bf16.mxu0 0
        %1036 = vmatpush1.bf16.msra.mxu0 %v1019
        %1037 = vmatprep.subr.bf16.mxu0 0
        %1038 = vmatpush1.bf16.msra.mxu0 %v1033
        %1039 = vmatprep.subr.bf16.mxu0 0
        %1040 = vmatpush1.bf16.msra.mxu0 0
        %1041 = vmatprep.subr.bf16.mxu0 0
        %1042 = vmatpush1.bf16.msra.mxu0 0
        %1043 = vmatprep.subr.bf16.mxu0 0
        %1044 = vmatpush1.bf16.msra.mxu0 0
        %1045 = vmatprep.subr.bf16.mxu0 0
        %1046 = vmatpush1.bf16.msra.mxu0 0
        %1047 = vmatprep.subr.bf16.mxu0 0
        %1048 = vmatpush1.bf16.msra.mxu0 0
        %1049 = vmatprep.subr.bf16.mxu0 0
        %1050 = vmatpush1.bf16.msra.mxu0 0
        %1051 = vmatprep.subr.bf16.mxu0 0
        %1052 = vmatpush1.bf16.msra.mxu0 0
        %1053 = vmatprep.subr.bf16.mxu0 0
        %1054 = vmatpush1.bf16.msra.mxu0 0
        %1055 = vmatprep.subr.bf16.mxu0 0
        %1056 = vmatpush1.bf16.msra.mxu0 0
        %1057 = vmatprep.subr.bf16.mxu0 0
        %1058 = vmatpush1.bf16.msra.mxu0 0
        %1059 = vmatprep.subr.bf16.mxu0 0
        %1060 = vmatpush1.bf16.msra.mxu0 0
        %1061 = vmatprep.subr.bf16.mxu0 0
        %1062 = vmatpush1.bf16.msra.mxu0 0
        %1063 = vmatprep.subr.bf16.mxu0 0
        %1064 = vmatpush1.bf16.msra.mxu0 0
        %1065 = vmatprep.subr.bf16.mxu0 0
        %1066 = vmatpush1.bf16.msra.mxu0 0
        %1067 = vmatprep.mubr.bf16.mxu0 0
        %1068 = vmatmul.mubr.bf16.gmra.mrb[0].mxu0 %v1024
        %v1069 = vpop.f32.mrb[0].mxu0
        %v1070 = vadd.f32 0.0, %v1069
        %v1071 = vpop.f32.mrb[0].mxu0
        %v1072 = vpop.f32.mrb[0].mxu0
        %v1073 = vadd.f32 0.0, %v1072
        %v1074 = vpop.f32.mrb[0].mxu0
        %1075 = vmatprep.mubr.bf16.mxu0 0
        %1076 = vmatmul.mubr.bf16.gmra.mrb[0].mxu0 %v1027
        %v1077 = vpop.f32.mrb[0].mxu0
        %v1078 = vadd.f32 0.0, %v1077
        %v1079 = vpop.f32.mrb[0].mxu0
        %v1080 = vpop.f32.mrb[0].mxu0
        %v1081 = vpop.f32.mrb[0].mxu0
        %1082 = vdwg.mxu0
        %1085 = vrot.lane.b32.xlu0 %v910, 120
        %v1086 = vpop.permute.xlu0 %1085
        %1087 = vrot.lane.b32.xlu0 %v911, 120
        %v1088 = vpop.permute.xlu0 %1087
        %1089 = vrot.lane.b32.xlu0 %v912, 88
        %v1090 = vpop.permute.xlu0 %1089
        %1091 = vrot.lane.b32.xlu0 %v913, 88
        %v1092 = vpop.permute.xlu0 %1091
        %v1094 = vsel %vm920, %v1086, 0
        %v1097 = vsel %vm920, %v1088, 0
        %v1100 = vsel %vm920, %v1090, 0
        %v1103 = vsel %vm920, %v1092, 0
        %1105 = vmatprep.subr.bf16.mxu0 0
        %1106 = vmatpush1.bf16.xpose.msra.mxu0 %v1100
        %1107 = vmatprep.subr.bf16.mxu0 0
        %1108 = vmatpush1.bf16.xpose.msra.mxu0 %v1103
        %1109 = vmatprep.subr.bf16.mxu0 0
        %1110 = vmatpush1.bf16.xpose.msra.mxu0 0
        %1111 = vmatprep.subr.bf16.mxu0 0
        %1112 = vmatpush1.bf16.xpose.msra.mxu0 0
        %1113 = vmatprep.subr.bf16.mxu0 0
        %1114 = vmatpush1.bf16.xpose.msra.mxu0 0
        %1115 = vmatprep.subr.bf16.mxu0 0
        %1116 = vmatpush1.bf16.xpose.msra.mxu0 0
        %1117 = vmatprep.subr.bf16.mxu0 0
        %1118 = vmatpush1.bf16.xpose.msra.mxu0 0
        %1119 = vmatprep.subr.bf16.mxu0 0
        %1120 = vmatpush1.bf16.xpose.msra.mxu0 0
        %1121 = vmatprep.subr.bf16.mxu0 0
        %1122 = vmatpush1.bf16.xpose.msra.mxu0 0
        %1123 = vmatprep.subr.bf16.mxu0 0
        %1124 = vmatpush1.bf16.xpose.msra.mxu0 0
        %1125 = vmatprep.subr.bf16.mxu0 0
        %1126 = vmatpush1.bf16.xpose.msra.mxu0 0
        %1127 = vmatprep.subr.bf16.mxu0 0
        %1128 = vmatpush1.bf16.xpose.msra.mxu0 0
        %1129 = vmatprep.subr.bf16.mxu0 0
        %1130 = vmatpush1.bf16.xpose.msra.mxu0 0
        %1131 = vmatprep.subr.bf16.mxu0 0
        %1132 = vmatpush1.bf16.xpose.msra.mxu0 0
        %1133 = vmatprep.subr.bf16.mxu0 0
        %1134 = vmatpush1.bf16.xpose.msra.mxu0 0
        %1135 = vmatprep.subr.bf16.mxu0 0
        %1136 = vmatpush1.bf16.xpose.msra.mxu0 0
        %1137 = vmatprep.mubr.bf16.mxu0 0
        %1138 = vmatmul.mubr.bf16.gmra.mrb[0].mxu0 %v1094
        %v1139 = vpop.f32.mrb[0].mxu0
        %v1140 = vadd.f32 0.0, %v1139
        %v1141 = vpop.f32.mrb[0].mxu0
        %v1142 = vpop.f32.mrb[0].mxu0
        %v1143 = vadd.f32 0.0, %v1142
        %v1144 = vpop.f32.mrb[0].mxu0
        %1145 = vmatprep.mubr.bf16.mxu0 0
        %1146 = vmatmul.mubr.bf16.gmra.mrb[0].mxu0 %v1097
        %v1147 = vpop.f32.mrb[0].mxu0
        %v1148 = vadd.f32 0.0, %v1147
        %v1149 = vpop.f32.mrb[0].mxu0
        %v1150 = vpop.f32.mrb[0].mxu0
        %v1151 = vpop.f32.mrb[0].mxu0
        %1152 = vdwg.mxu0
        %v1153 = vsel %vm981, %v1140, -inf
        %1154 = vmax.xlane.f32.xlu0 %v1153
        %v1155 = vpop.xlane.xlu0 %1154
        %v1156 = vsel %vm981, %v1143, -inf
        %1157 = vmax.xlane.f32.xlu0 %v1156
        %v1158 = vpop.xlane.xlu0 %1157
        %v1159 = vsel %vm988, %v1148, -inf
        %1160 = vmax.xlane.f32.xlu0 %v1159
        %v1161 = vpop.xlane.xlu0 %1160
        %v1162 = vsub.f32 %v1140, %v1155
        %v1163 = vsub.f32 %v1143, %v1158
        %v1164 = vsub.f32 %v1148, %v1161
        %v1165 = vmul.f32 %v1162, 1.442695
        %v1166 = vpow.pop %v1165
        %v1167 = vmul.f32 %v1163, 1.442695
        %v1168 = vpow.pop %v1167
        %v1169 = vmul.f32 %v1164, 1.442695
        %v1170 = vpow.pop %v1169
        %v1171 = vsel %vm981, %v1166, 0.0
        %1172 = vadd.xlane.f32.xlu0 %v1171
        %v1173 = vpop.xlane.xlu0 %1172
        %v1174 = vsel %vm981, %v1168, 0.0
        %1175 = vadd.xlane.f32.xlu0 %v1174
        %v1176 = vpop.xlane.xlu0 %1175
        %v1177 = vsel %vm988, %v1170, 0.0
        %1178 = vadd.xlane.f32.xlu0 %v1177
        %v1179 = vpop.xlane.xlu0 %1178
        %v1180 = vrcp.pop %v1173
        %v1181 = vrcp.pop %v1176
        %v1182 = vrcp.pop %v1179
        %v1183 = vmul.f32 %v1166, %v1180
        %v1184 = vmul.f32 %v1168, %v1181
        %v1185 = vmul.f32 %v1170, %v1182
        %v1186 = vpack.c.bf16 %v1184, %v1183
        %v1187 = vpack.c.bf16 %v1185, %v1185
        %1188 = vrot.lane.b32.xlu0 %v912, 56
        %v1189 = vpop.permute.xlu0 %1188
        %1190 = vrot.lane.b32.xlu0 %v913, 56
        %v1191 = vpop.permute.xlu0 %1190
        %v1194 = vsel %vm981, %v1186, 0
        %v1197 = vsel %vm981, %v1187, 0
        %v1200 = vand.u32 %v1191, %v1031
        %1202 = vmatprep.subr.bf16.mxu0 0
        %1203 = vmatpush1.bf16.msra.mxu0 %v1189
        %1204 = vmatprep.subr.bf16.mxu0 0
        %1205 = vmatpush1.bf16.msra.mxu0 %v1200
        %1206 = vmatprep.subr.bf16.mxu0 0
        %1207 = vmatpush1.bf16.msra.mxu0 0
        %1208 = vmatprep.subr.bf16.mxu0 0
        %1209 = vmatpush1.bf16.msra.mxu0 0
        %1210 = vmatprep.subr.bf16.mxu0 0
        %1211 = vmatpush1.bf16.msra.mxu0 0
        %1212 = vmatprep.subr.bf16.mxu0 0
        %1213 = vmatpush1.bf16.msra.mxu0 0
        %1214 = vmatprep.subr.bf16.mxu0 0
        %1215 = vmatpush1.bf16.msra.mxu0 0
        %1216 = vmatprep.subr.bf16.mxu0 0
        %1217 = vmatpush1.bf16.msra.mxu0 0
        %1218 = vmatprep.subr.bf16.mxu0 0
        %1219 = vmatpush1.bf16.msra.mxu0 0
        %1220 = vmatprep.subr.bf16.mxu0 0
        %1221 = vmatpush1.bf16.msra.mxu0 0
        %1222 = vmatprep.subr.bf16.mxu0 0
        %1223 = vmatpush1.bf16.msra.mxu0 0
        %1224 = vmatprep.subr.bf16.mxu0 0
        %1225 = vmatpush1.bf16.msra.mxu0 0
        %1226 = vmatprep.subr.bf16.mxu0 0
        %1227 = vmatpush1.bf16.msra.mxu0 0
        %1228 = vmatprep.subr.bf16.mxu0 0
        %1229 = vmatpush1.bf16.msra.mxu0 0
        %1230 = vmatprep.subr.bf16.mxu0 0
        %1231 = vmatpush1.bf16.msra.mxu0 0
        %1232 = vmatprep.subr.bf16.mxu0 0
        %1233 = vmatpush1.bf16.msra.mxu0 0
        %1234 = vmatprep.mubr.bf16.mxu0 0
        %1235 = vmatmul.mubr.bf16.gmra.mrb[0].mxu0 %v1194
        %v1236 = vpop.f32.mrb[0].mxu0
        %v1237 = vadd.f32 0.0, %v1236
        %v1238 = vpop.f32.mrb[0].mxu0
        %v1239 = vpop.f32.mrb[0].mxu0
        %v1240 = vadd.f32 0.0, %v1239
        %v1241 = vpop.f32.mrb[0].mxu0
        %1242 = vmatprep.mubr.bf16.mxu0 0
        %1243 = vmatmul.mubr.bf16.gmra.mrb[0].mxu0 %v1197
        %v1244 = vpop.f32.mrb[0].mxu0
        %v1245 = vadd.f32 0.0, %v1244
        %v1246 = vpop.f32.mrb[0].mxu0
        %v1247 = vpop.f32.mrb[0].mxu0
        %v1248 = vpop.f32.mrb[0].mxu0
        %1249 = vdwg.mxu0
        %1250 = vrot.lane.b32.xlu0 %v910, 112
        %v1251 = vpop.permute.xlu0 %1250
        %1252 = vrot.lane.b32.xlu0 %v911, 112
        %v1253 = vpop.permute.xlu0 %1252
        %1254 = vrot.lane.b32.xlu0 %v912, 80
        %v1255 = vpop.permute.xlu0 %1254
        %1256 = vrot.lane.b32.xlu0 %v913, 80
        %v1257 = vpop.permute.xlu0 %1256
        %v1259 = vsel %vm920, %v1251, 0
        %v1262 = vsel %vm920, %v1253, 0
        %v1265 = vsel %vm920, %v1255, 0
        %v1268 = vsel %vm920, %v1257, 0
        %1270 = vmatprep.subr.bf16.mxu0 0
        %1271 = vmatpush1.bf16.xpose.msra.mxu0 %v1265
        %1272 = vmatprep.subr.bf16.mxu0 0
        %1273 = vmatpush1.bf16.xpose.msra.mxu0 %v1268
        %1274 = vmatprep.subr.bf16.mxu0 0
        %1275 = vmatpush1.bf16.xpose.msra.mxu0 0
        %1276 = vmatprep.subr.bf16.mxu0 0
        %1277 = vmatpush1.bf16.xpose.msra.mxu0 0
        %1278 = vmatprep.subr.bf16.mxu0 0
        %1279 = vmatpush1.bf16.xpose.msra.mxu0 0
        %1280 = vmatprep.subr.bf16.mxu0 0
        %1281 = vmatpush1.bf16.xpose.msra.mxu0 0
        %1282 = vmatprep.subr.bf16.mxu0 0
        %1283 = vmatpush1.bf16.xpose.msra.mxu0 0
        %1284 = vmatprep.subr.bf16.mxu0 0
        %1285 = vmatpush1.bf16.xpose.msra.mxu0 0
        %1286 = vmatprep.subr.bf16.mxu0 0
        %1287 = vmatpush1.bf16.xpose.msra.mxu0 0
        %1288 = vmatprep.subr.bf16.mxu0 0
        %1289 = vmatpush1.bf16.xpose.msra.mxu0 0
        %1290 = vmatprep.subr.bf16.mxu0 0
        %1291 = vmatpush1.bf16.xpose.msra.mxu0 0
        %1292 = vmatprep.subr.bf16.mxu0 0
        %1293 = vmatpush1.bf16.xpose.msra.mxu0 0
        %1294 = vmatprep.subr.bf16.mxu0 0
        %1295 = vmatpush1.bf16.xpose.msra.mxu0 0
        %1296 = vmatprep.subr.bf16.mxu0 0
        %1297 = vmatpush1.bf16.xpose.msra.mxu0 0
        %1298 = vmatprep.subr.bf16.mxu0 0
        %1299 = vmatpush1.bf16.xpose.msra.mxu0 0
        %1300 = vmatprep.subr.bf16.mxu0 0
        %1301 = vmatpush1.bf16.xpose.msra.mxu0 0
        %1302 = vmatprep.mubr.bf16.mxu0 0
        %1303 = vmatmul.mubr.bf16.gmra.mrb[0].mxu0 %v1259
        %v1304 = vpop.f32.mrb[0].mxu0
        %v1305 = vadd.f32 0.0, %v1304
        %v1306 = vpop.f32.mrb[0].mxu0
        %v1307 = vpop.f32.mrb[0].mxu0
        %v1308 = vadd.f32 0.0, %v1307
        %v1309 = vpop.f32.mrb[0].mxu0
        %1310 = vmatprep.mubr.bf16.mxu0 0
        %1311 = vmatmul.mubr.bf16.gmra.mrb[0].mxu0 %v1262
        %v1312 = vpop.f32.mrb[0].mxu0
        %v1313 = vadd.f32 0.0, %v1312
        %v1314 = vpop.f32.mrb[0].mxu0
        %v1315 = vpop.f32.mrb[0].mxu0
        %v1316 = vpop.f32.mrb[0].mxu0
        %1317 = vdwg.mxu0
        %v1318 = vsel %vm981, %v1305, -inf
        %1319 = vmax.xlane.f32.xlu0 %v1318
        %v1320 = vpop.xlane.xlu0 %1319
        %v1321 = vsel %vm981, %v1308, -inf
        %1322 = vmax.xlane.f32.xlu0 %v1321
        %v1323 = vpop.xlane.xlu0 %1322
        %v1324 = vsel %vm988, %v1313, -inf
        %1325 = vmax.xlane.f32.xlu0 %v1324
        %v1326 = vpop.xlane.xlu0 %1325
        %v1327 = vsub.f32 %v1305, %v1320
        %v1328 = vsub.f32 %v1308, %v1323
        %v1329 = vsub.f32 %v1313, %v1326
        %v1330 = vmul.f32 %v1327, 1.442695
        %v1331 = vpow.pop %v1330
        %v1332 = vmul.f32 %v1328, 1.442695
        %v1333 = vpow.pop %v1332
        %v1334 = vmul.f32 %v1329, 1.442695
        %v1335 = vpow.pop %v1334
        %v1336 = vsel %vm981, %v1331, 0.0
        %1337 = vadd.xlane.f32.xlu0 %v1336
        %v1338 = vpop.xlane.xlu0 %1337
        %v1339 = vsel %vm981, %v1333, 0.0
        %1340 = vadd.xlane.f32.xlu0 %v1339
        %v1341 = vpop.xlane.xlu0 %1340
        %v1342 = vsel %vm988, %v1335, 0.0
        %1343 = vadd.xlane.f32.xlu0 %v1342
        %v1344 = vpop.xlane.xlu0 %1343
        %v1345 = vrcp.pop %v1338
        %v1346 = vrcp.pop %v1341
        %v1347 = vrcp.pop %v1344
        %v1348 = vmul.f32 %v1331, %v1345
        %v1349 = vmul.f32 %v1333, %v1346
        %v1350 = vmul.f32 %v1335, %v1347
        %v1351 = vpack.c.bf16 %v1349, %v1348
        %v1352 = vpack.c.bf16 %v1350, %v1350
        %1353 = vrot.lane.b32.xlu0 %v912, 48
        %v1354 = vpop.permute.xlu0 %1353
        %1355 = vrot.lane.b32.xlu0 %v913, 48
        %v1356 = vpop.permute.xlu0 %1355
        %v1359 = vsel %vm981, %v1351, 0
        %v1362 = vsel %vm981, %v1352, 0
        %v1365 = vand.u32 %v1356, %v1031
        %1367 = vmatprep.subr.bf16.mxu0 0
        %1368 = vmatpush1.bf16.msra.mxu0 %v1354
        %1369 = vmatprep.subr.bf16.mxu0 0
        %1370 = vmatpush1.bf16.msra.mxu0 %v1365
        %1371 = vmatprep.subr.bf16.mxu0 0
        %1372 = vmatpush1.bf16.msra.mxu0 0
        %1373 = vmatprep.subr.bf16.mxu0 0
        %1374 = vmatpush1.bf16.msra.mxu0 0
        %1375 = vmatprep.subr.bf16.mxu0 0
        %1376 = vmatpush1.bf16.msra.mxu0 0
        %1377 = vmatprep.subr.bf16.mxu0 0
        %1378 = vmatpush1.bf16.msra.mxu0 0
        %1379 = vmatprep.subr.bf16.mxu0 0
        %1380 = vmatpush1.bf16.msra.mxu0 0
        %1381 = vmatprep.subr.bf16.mxu0 0
        %1382 = vmatpush1.bf16.msra.mxu0 0
        %1383 = vmatprep.subr.bf16.mxu0 0
        %1384 = vmatpush1.bf16.msra.mxu0 0
        %1385 = vmatprep.subr.bf16.mxu0 0
        %1386 = vmatpush1.bf16.msra.mxu0 0
        %1387 = vmatprep.subr.bf16.mxu0 0
        %1388 = vmatpush1.bf16.msra.mxu0 0
        %1389 = vmatprep.subr.bf16.mxu0 0
        %1390 = vmatpush1.bf16.msra.mxu0 0
        %1391 = vmatprep.subr.bf16.mxu0 0
        %1392 = vmatpush1.bf16.msra.mxu0 0
        %1393 = vmatprep.subr.bf16.mxu0 0
        %1394 = vmatpush1.bf16.msra.mxu0 0
        %1395 = vmatprep.subr.bf16.mxu0 0
        %1396 = vmatpush1.bf16.msra.mxu0 0
        %1397 = vmatprep.subr.bf16.mxu0 0
        %1398 = vmatpush1.bf16.msra.mxu0 0
        %1399 = vmatprep.mubr.bf16.mxu0 0
        %1400 = vmatmul.mubr.bf16.gmra.mrb[0].mxu0 %v1359
        %v1401 = vpop.f32.mrb[0].mxu0
        %v1402 = vadd.f32 0.0, %v1401
        %v1403 = vpop.f32.mrb[0].mxu0
        %v1404 = vpop.f32.mrb[0].mxu0
        %v1405 = vadd.f32 0.0, %v1404
        %v1406 = vpop.f32.mrb[0].mxu0
        %1407 = vmatprep.mubr.bf16.mxu0 0
        %1408 = vmatmul.mubr.bf16.gmra.mrb[0].mxu0 %v1362
        %v1409 = vpop.f32.mrb[0].mxu0
        %v1410 = vadd.f32 0.0, %v1409
        %v1411 = vpop.f32.mrb[0].mxu0
        %v1412 = vpop.f32.mrb[0].mxu0
        %v1413 = vpop.f32.mrb[0].mxu0
        %1414 = vdwg.mxu0
        %1415 = vrot.lane.b32.xlu0 %v910, 104
        %v1416 = vpop.permute.xlu0 %1415
        %1417 = vrot.lane.b32.xlu0 %v911, 104
        %v1418 = vpop.permute.xlu0 %1417
        %1419 = vrot.lane.b32.xlu0 %v912, 72
        %v1420 = vpop.permute.xlu0 %1419
        %1421 = vrot.lane.b32.xlu0 %v913, 72
        %v1422 = vpop.permute.xlu0 %1421
        %v1424 = vsel %vm920, %v1416, 0
        %v1427 = vsel %vm920, %v1418, 0
        %v1430 = vsel %vm920, %v1420, 0
        %v1433 = vsel %vm920, %v1422, 0
        %1435 = vmatprep.subr.bf16.mxu0 0
        %1436 = vmatpush1.bf16.xpose.msra.mxu0 %v1430
        %1437 = vmatprep.subr.bf16.mxu0 0
        %1438 = vmatpush1.bf16.xpose.msra.mxu0 %v1433
        %1439 = vmatprep.subr.bf16.mxu0 0
        %1440 = vmatpush1.bf16.xpose.msra.mxu0 0
        %1441 = vmatprep.subr.bf16.mxu0 0
        %1442 = vmatpush1.bf16.xpose.msra.mxu0 0
        %1443 = vmatprep.subr.bf16.mxu0 0
        %1444 = vmatpush1.bf16.xpose.msra.mxu0 0
        %1445 = vmatprep.subr.bf16.mxu0 0
        %1446 = vmatpush1.bf16.xpose.msra.mxu0 0
        %1447 = vmatprep.subr.bf16.mxu0 0
        %1448 = vmatpush1.bf16.xpose.msra.mxu0 0
        %1449 = vmatprep.subr.bf16.mxu0 0
        %1450 = vmatpush1.bf16.xpose.msra.mxu0 0
        %1451 = vmatprep.subr.bf16.mxu0 0
        %1452 = vmatpush1.bf16.xpose.msra.mxu0 0
        %1453 = vmatprep.subr.bf16.mxu0 0
        %1454 = vmatpush1.bf16.xpose.msra.mxu0 0
        %1455 = vmatprep.subr.bf16.mxu0 0
        %1456 = vmatpush1.bf16.xpose.msra.mxu0 0
        %1457 = vmatprep.subr.bf16.mxu0 0
        %1458 = vmatpush1.bf16.xpose.msra.mxu0 0
        %1459 = vmatprep.subr.bf16.mxu0 0
        %1460 = vmatpush1.bf16.xpose.msra.mxu0 0
        %1461 = vmatprep.subr.bf16.mxu0 0
        %1462 = vmatpush1.bf16.xpose.msra.mxu0 0
        %1463 = vmatprep.subr.bf16.mxu0 0
        %1464 = vmatpush1.bf16.xpose.msra.mxu0 0
        %1465 = vmatprep.subr.bf16.mxu0 0
        %1466 = vmatpush1.bf16.xpose.msra.mxu0 0
        %1467 = vmatprep.mubr.bf16.mxu0 0
        %1468 = vmatmul.mubr.bf16.gmra.mrb[0].mxu0 %v1424
        %v1469 = vpop.f32.mrb[0].mxu0
        %v1470 = vadd.f32 0.0, %v1469
        %v1471 = vpop.f32.mrb[0].mxu0
        %v1472 = vpop.f32.mrb[0].mxu0
        %v1473 = vadd.f32 0.0, %v1472
        %v1474 = vpop.f32.mrb[0].mxu0
        %1475 = vmatprep.mubr.bf16.mxu0 0
        %1476 = vmatmul.mubr.bf16.gmra.mrb[0].mxu0 %v1427
        %v1477 = vpop.f32.mrb[0].mxu0
        %v1478 = vadd.f32 0.0, %v1477
        %v1479 = vpop.f32.mrb[0].mxu0
        %v1480 = vpop.f32.mrb[0].mxu0
        %v1481 = vpop.f32.mrb[0].mxu0
        %1482 = vdwg.mxu0
        %v1483 = vsel %vm981, %v1470, -inf
        %1484 = vmax.xlane.f32.xlu0 %v1483
        %v1485 = vpop.xlane.xlu0 %1484
        %v1486 = vsel %vm981, %v1473, -inf
        %1487 = vmax.xlane.f32.xlu0 %v1486
        %v1488 = vpop.xlane.xlu0 %1487
        %v1489 = vsel %vm988, %v1478, -inf
        %1490 = vmax.xlane.f32.xlu0 %v1489
        %v1491 = vpop.xlane.xlu0 %1490
        %v1492 = vsub.f32 %v1470, %v1485
        %v1493 = vsub.f32 %v1473, %v1488
        %v1494 = vsub.f32 %v1478, %v1491
        %v1495 = vmul.f32 %v1492, 1.442695
        %v1496 = vpow.pop %v1495
        %v1497 = vmul.f32 %v1493, 1.442695
        %v1498 = vpow.pop %v1497
        %v1499 = vmul.f32 %v1494, 1.442695
        %v1500 = vpow.pop %v1499
        %v1501 = vsel %vm981, %v1496, 0.0
        %1502 = vadd.xlane.f32.xlu0 %v1501
        %v1503 = vpop.xlane.xlu0 %1502
        %v1504 = vsel %vm981, %v1498, 0.0
        %1505 = vadd.xlane.f32.xlu0 %v1504
        %v1506 = vpop.xlane.xlu0 %1505
        %v1507 = vsel %vm988, %v1500, 0.0
        %1508 = vadd.xlane.f32.xlu0 %v1507
        %v1509 = vpop.xlane.xlu0 %1508
        %v1510 = vrcp.pop %v1503
        %v1511 = vrcp.pop %v1506
        %v1512 = vrcp.pop %v1509
        %v1513 = vmul.f32 %v1496, %v1510
        %v1514 = vmul.f32 %v1498, %v1511
        %v1515 = vmul.f32 %v1500, %v1512
        %v1516 = vpack.c.bf16 %v1514, %v1513
        %v1517 = vpack.c.bf16 %v1515, %v1515
        %1518 = vrot.lane.b32.xlu0 %v912, 40
        %v1519 = vpop.permute.xlu0 %1518
        %1520 = vrot.lane.b32.xlu0 %v913, 40
        %v1521 = vpop.permute.xlu0 %1520
        %v1524 = vsel %vm981, %v1516, 0
        %v1527 = vsel %vm981, %v1517, 0
        %v1530 = vand.u32 %v1521, %v1031
        %1532 = vmatprep.subr.bf16.mxu0 0
        %1533 = vmatpush1.bf16.msra.mxu0 %v1519
        %1534 = vmatprep.subr.bf16.mxu0 0
        %1535 = vmatpush1.bf16.msra.mxu0 %v1530
        %1536 = vmatprep.subr.bf16.mxu0 0
        %1537 = vmatpush1.bf16.msra.mxu0 0
        %1538 = vmatprep.subr.bf16.mxu0 0
        %1539 = vmatpush1.bf16.msra.mxu0 0
        %1540 = vmatprep.subr.bf16.mxu0 0
        %1541 = vmatpush1.bf16.msra.mxu0 0
        %1542 = vmatprep.subr.bf16.mxu0 0
        %1543 = vmatpush1.bf16.msra.mxu0 0
        %1544 = vmatprep.subr.bf16.mxu0 0
        %1545 = vmatpush1.bf16.msra.mxu0 0
        %1546 = vmatprep.subr.bf16.mxu0 0
        %1547 = vmatpush1.bf16.msra.mxu0 0
        %1548 = vmatprep.subr.bf16.mxu0 0
        %1549 = vmatpush1.bf16.msra.mxu0 0
        %1550 = vmatprep.subr.bf16.mxu0 0
        %1551 = vmatpush1.bf16.msra.mxu0 0
        %1552 = vmatprep.subr.bf16.mxu0 0
        %1553 = vmatpush1.bf16.msra.mxu0 0
        %1554 = vmatprep.subr.bf16.mxu0 0
        %1555 = vmatpush1.bf16.msra.mxu0 0
        %1556 = vmatprep.subr.bf16.mxu0 0
        %1557 = vmatpush1.bf16.msra.mxu0 0
        %1558 = vmatprep.subr.bf16.mxu0 0
        %1559 = vmatpush1.bf16.msra.mxu0 0
        %1560 = vmatprep.subr.bf16.mxu0 0
        %1561 = vmatpush1.bf16.msra.mxu0 0
        %1562 = vmatprep.subr.bf16.mxu0 0
        %1563 = vmatpush1.bf16.msra.mxu0 0
        %1564 = vmatprep.mubr.bf16.mxu0 0
        %1565 = vmatmul.mubr.bf16.gmra.mrb[0].mxu0 %v1524
        %v1566 = vpop.f32.mrb[0].mxu0
        %v1567 = vadd.f32 0.0, %v1566
        %v1568 = vpop.f32.mrb[0].mxu0
        %v1569 = vpop.f32.mrb[0].mxu0
        %v1570 = vadd.f32 0.0, %v1569
        %v1571 = vpop.f32.mrb[0].mxu0
        %1572 = vmatprep.mubr.bf16.mxu0 0
        %1573 = vmatmul.mubr.bf16.gmra.mrb[0].mxu0 %v1527
        %v1574 = vpop.f32.mrb[0].mxu0
        %v1575 = vadd.f32 0.0, %v1574
        %v1576 = vpop.f32.mrb[0].mxu0
        %v1577 = vpop.f32.mrb[0].mxu0
        %v1578 = vpop.f32.mrb[0].mxu0
        %1579 = vdwg.mxu0
        %1583 = vrot.lane.b32.xlu0 %v1237, 8
        %v1584 = vpop.permute.xlu0 %1583
        %1585 = vrot.lane.b32.xlu0 %v1240, 8
        %v1586 = vpop.permute.xlu0 %1585
        %1587 = vrot.lane.b32.xlu0 %v1245, 8
        %v1588 = vpop.permute.xlu0 %1587
        %1595 = vrot.lane.b32.xlu0 %v1402, 16
        %v1596 = vpop.permute.xlu0 %1595
        %1597 = vrot.lane.b32.xlu0 %v1405, 16
        %v1598 = vpop.permute.xlu0 %1597
        %1599 = vrot.lane.b32.xlu0 %v1410, 16
        %v1600 = vpop.permute.xlu0 %1599
        %1607 = vrot.lane.b32.xlu0 %v1567, 24
        %v1608 = vpop.permute.xlu0 %1607
        %1609 = vrot.lane.b32.xlu0 %v1570, 24
        %v1610 = vpop.permute.xlu0 %1609
        %1611 = vrot.lane.b32.xlu0 %v1575, 24
        %v1612 = vpop.permute.xlu0 %1611
        %v1616 = vsel %vm920, %v1070, %v1584
        %v1617 = vsel %vm920, %v1073, %v1586
        %v1618 = vsel %vm920, %v1078, %v1588
        %vm1619 = vcmask 130048
        %v1620 = vsel %vm1619, %v1616, %v1596
        %v1621 = vsel %vm1619, %v1617, %v1598
        %v1622 = vsel %vm1619, %v1618, %v1600
        %vm1623 = vcmask 195584
        %v1624 = vsel %vm1623, %v1620, %v1608
        %v1625 = vsel %vm1623, %v1621, %v1610
        %v1626 = vsel %vm1623, %v1622, %v1612
        %v1627 = vpack.c.bf16 %v1625, %v1624
        %v1628 = vpack.c.bf16 %v1626, %v1626
        %v1629 = vld [vmem:[%s724] sm:$0xf]
        %v1630 = vld [vmem:[%s724 + $0x4] sm:$0xf]
        %v1631 = vld [vmem:[%s724 + $0x8] sm:$0xf]
        %v1632 = vld [vmem:[%s724 + $0xc] sm:$0xf]
        %v1633 = vld [vmem:[%s727] sm:$0x1]
        %v1635 = vlaneseq
        %v1636 = vshrl.u32 %v1635, 7
        %v1637 = vsub.s32 0, %v1636
        %v1638 = vrot.slane %v1633, %v1637
        %v1644 = vunpack.c.l.b16 %v1629
        %v1645 = vunpack.c.l.b16 %v1630
        %v1646 = vunpack.c.l.b16 %v1631
        %v1647 = vunpack.c.l.b16 %v1632
        %v1648 = vpack.c.b16 %v1645, %v1644
        %v1649 = vpack.c.b16 %v1647, %v1646
        %v1653 = vsel %vm768, %v1627, 0
        %v1656 = vsel %vm768, %v1628, 0
        %1658 = vmatprep.subr.bf16.mxu0 0
        %1659 = vmatpush1.bf16.msra.mxu0 %v1648
        %1660 = vmatprep.subr.bf16.mxu0 0
        %1661 = vmatpush1.bf16.msra.mxu0 %v1649
        %1662 = vmatprep.subr.bf16.mxu0 0
        %1663 = vmatpush1.bf16.msra.mxu0 0
        %1664 = vmatprep.subr.bf16.mxu0 0
        %1665 = vmatpush1.bf16.msra.mxu0 0
        %1666 = vmatprep.subr.bf16.mxu0 0
        %1667 = vmatpush1.bf16.msra.mxu0 0
        %1668 = vmatprep.subr.bf16.mxu0 0
        %1669 = vmatpush1.bf16.msra.mxu0 0
        %1670 = vmatprep.subr.bf16.mxu0 0
        %1671 = vmatpush1.bf16.msra.mxu0 0
        %1672 = vmatprep.subr.bf16.mxu0 0
        %1673 = vmatpush1.bf16.msra.mxu0 0
        %1674 = vmatprep.subr.bf16.mxu0 0
        %1675 = vmatpush1.bf16.msra.mxu0 0
        %1676 = vmatprep.subr.bf16.mxu0 0
        %1677 = vmatpush1.bf16.msra.mxu0 0
        %1678 = vmatprep.subr.bf16.mxu0 0
        %1679 = vmatpush1.bf16.msra.mxu0 0
        %1680 = vmatprep.subr.bf16.mxu0 0
        %1681 = vmatpush1.bf16.msra.mxu0 0
        %1682 = vmatprep.subr.bf16.mxu0 0
        %1683 = vmatpush1.bf16.msra.mxu0 0
        %1684 = vmatprep.subr.bf16.mxu0 0
        %1685 = vmatpush1.bf16.msra.mxu0 0
        %1686 = vmatprep.subr.bf16.mxu0 0
        %1687 = vmatpush1.bf16.msra.mxu0 0
        %1688 = vmatprep.subr.bf16.mxu0 0
        %1689 = vmatpush1.bf16.msra.mxu0 0
        %1690 = vmatprep.mubr.bf16.mxu0 0
        %1691 = vmatmul.mubr.bf16.gmra.mrb[0].mxu0 %v1653
        %v1692 = vpop.f32.mrb[0].mxu0
        %v1693 = vadd.f32 %v1638, %v1692
        %v1694 = vpop.f32.mrb[0].mxu0
        %v1695 = vpop.f32.mrb[0].mxu0
        %v1696 = vadd.f32 %v1638, %v1695
        %v1697 = vpop.f32.mrb[0].mxu0
        %1698 = vmatprep.mubr.bf16.mxu0 0
        %1699 = vmatmul.mubr.bf16.gmra.mrb[0].mxu0 %v1656
        %v1700 = vpop.f32.mrb[0].mxu0
        %v1701 = vadd.f32 %v1638, %v1700
        %v1702 = vpop.f32.mrb[0].mxu0
        %v1703 = vpop.f32.mrb[0].mxu0
        %v1704 = vpop.f32.mrb[0].mxu0
        %1705 = vdwg.mxu0
        %v1706 = vadd.f32 %v763, %v1693
        %v1707 = vadd.f32 %v764, %v1696
        %v1708 = vadd.f32 %v765, %v1701
        %v1709 = vld [vmem:[%s730] sm:$0x1]
        %v1710 = vld [vmem:[%s733] sm:$0x1]
        %v1711 = vsel %vm768, %v1706, 0.0
        %1712 = vadd.xlane.f32.xlu0 %v1711
        %v1713 = vpop.xlane.xlu0 %1712
        %v1714 = vsel %vm768, %v1707, 0.0
        %1715 = vadd.xlane.f32.xlu0 %v1714
        %v1716 = vpop.xlane.xlu0 %1715
        %v1717 = vsel %vm775, %v1708, 0.0
        %1718 = vadd.xlane.f32.xlu0 %v1717
        %v1719 = vpop.xlane.xlu0 %1718
        %v1720 = vmul.f32 %v1713, %v779
        %v1721 = vmul.f32 %v1716, %v779
        %v1722 = vmul.f32 %v1719, %v779
        %v1723 = vsub.f32 %v1706, %v1720
        %v1724 = vsub.f32 %v1707, %v1721
        %v1725 = vsub.f32 %v1708, %v1722
        %v1726 = vmul.f32 %v1723, %v1723
        %v1727 = vmul.f32 %v1724, %v1724
        %v1728 = vmul.f32 %v1725, %v1725
        %v1729 = vsel %vm768, %v1726, 0.0
        %1730 = vadd.xlane.f32.xlu0 %v1729
        %v1731 = vpop.xlane.xlu0 %1730
        %v1732 = vsel %vm768, %v1727, 0.0
        %1733 = vadd.xlane.f32.xlu0 %v1732
        %v1734 = vpop.xlane.xlu0 %1733
        %v1735 = vsel %vm775, %v1728, 0.0
        %1736 = vadd.xlane.f32.xlu0 %v1735
        %v1737 = vpop.xlane.xlu0 %1736
        %v1738 = vmul.f32 %v1731, %v779
        %v1739 = vmul.f32 %v1734, %v779
        %v1740 = vmul.f32 %v1737, %v779
        %v1741 = vadd.f32 %v1738, 1e-05
        %v1742 = vadd.f32 %v1739, 1e-05
        %v1743 = vadd.f32 %v1740, 1e-05
        %v1744 = vrsqrt.pop %v1741
        %v1745 = vrsqrt.pop %v1742
        %v1746 = vrsqrt.pop %v1743
        %v1747 = vmul.f32 %v1723, %v1744
        %v1748 = vmul.f32 %v1724, %v1745
        %v1749 = vmul.f32 %v1725, %v1746
        %v1751 = vlaneseq
        %v1752 = vshrl.u32 %v1751, 7
        %v1753 = vsub.s32 0, %v1752
        %v1754 = vrot.slane %v1709, %v1753
        %v1756 = vmul.f32 %v1747, %v1754
        %v1757 = vmul.f32 %v1748, %v1754
        %v1758 = vmul.f32 %v1749, %v1754
        %v1760 = vlaneseq
        %v1761 = vshrl.u32 %v1760, 7
        %v1762 = vsub.s32 0, %v1761
        %v1763 = vrot.slane %v1710, %v1762
        %v1765 = vadd.f32 %v1756, %v1763
        %v1766 = vadd.f32 %v1757, %v1763
        %v1767 = vadd.f32 %v1758, %v1763
        %v1768 = vpack.c.bf16 %v1766, %v1765
        %v1769 = vpack.c.bf16 %v1767, %v1767
        %v1770 = vld [vmem:[%s738] sm:$0xf]
        %v1771 = vld [vmem:[%s738 + $0x4] sm:$0xf]
        %v1772 = vld [vmem:[%s738 + $0x8] sm:$0xf]
        %v1773 = vld [vmem:[%s738 + $0xc] sm:$0xf]
        %v1774 = vld [vmem:[%s741] sm:$0x1]
        %v1776 = vlaneseq
        %v1777 = vshrl.u32 %v1776, 7
        %v1778 = vsub.s32 0, %v1777
        %v1779 = vrot.slane %v1774, %v1778
        %v1785 = vunpack.c.l.b16 %v1770
        %v1786 = vunpack.c.l.b16 %v1771
        %v1787 = vunpack.c.l.b16 %v1772
        %v1788 = vunpack.c.l.b16 %v1773
        %v1789 = vpack.c.b16 %v1786, %v1785
        %v1790 = vpack.c.b16 %v1788, %v1787
        %v1794 = vsel %vm768, %v1768, 0
        %v1797 = vsel %vm768, %v1769, 0
        %1799 = vmatprep.subr.bf16.mxu0 0
        %1800 = vmatpush1.bf16.msra.mxu0 %v1789
        %1801 = vmatprep.subr.bf16.mxu0 0
        %1802 = vmatpush1.bf16.msra.mxu0 %v1790
        %1803 = vmatprep.subr.bf16.mxu0 0
        %1804 = vmatpush1.bf16.msra.mxu0 0
        %1805 = vmatprep.subr.bf16.mxu0 0
        %1806 = vmatpush1.bf16.msra.mxu0 0
        %1807 = vmatprep.subr.bf16.mxu0 0
        %1808 = vmatpush1.bf16.msra.mxu0 0
        %1809 = vmatprep.subr.bf16.mxu0 0
        %1810 = vmatpush1.bf16.msra.mxu0 0
        %1811 = vmatprep.subr.bf16.mxu0 0
        %1812 = vmatpush1.bf16.msra.mxu0 0
        %1813 = vmatprep.subr.bf16.mxu0 0
        %1814 = vmatpush1.bf16.msra.mxu0 0
        %1815 = vmatprep.subr.bf16.mxu0 0
        %1816 = vmatpush1.bf16.msra.mxu0 0
        %1817 = vmatprep.subr.bf16.mxu0 0
        %1818 = vmatpush1.bf16.msra.mxu0 0
        %1819 = vmatprep.subr.bf16.mxu0 0
        %1820 = vmatpush1.bf16.msra.mxu0 0
        %1821 = vmatprep.subr.bf16.mxu0 0
        %1822 = vmatpush1.bf16.msra.mxu0 0
        %1823 = vmatprep.subr.bf16.mxu0 0
        %1824 = vmatpush1.bf16.msra.mxu0 0
        %1825 = vmatprep.subr.bf16.mxu0 0
        %1826 = vmatpush1.bf16.msra.mxu0 0
        %1827 = vmatprep.subr.bf16.mxu0 0
        %1828 = vmatpush1.bf16.msra.mxu0 0
        %1829 = vmatprep.subr.bf16.mxu0 0
        %1830 = vmatpush1.bf16.msra.mxu0 0
        %1831 = vmatprep.mubr.bf16.mxu0 0
        %1832 = vmatmul.mubr.bf16.gmra.mrb[0].mxu0 %v1794
        %v1833 = vpop.f32.mrb[0].mxu0
        %v1834 = vadd.f32 %v1779, %v1833
        %v1835 = vpop.f32.mrb[0].mxu0
        %v1836 = vpop.f32.mrb[0].mxu0
        %v1837 = vadd.f32 %v1779, %v1836
        %v1838 = vpop.f32.mrb[0].mxu0
        %1839 = vmatprep.mubr.bf16.mxu0 0
        %1840 = vmatmul.mubr.bf16.gmra.mrb[0].mxu0 %v1797
        %v1841 = vpop.f32.mrb[0].mxu0
        %v1842 = vadd.f32 %v1779, %v1841
        %v1843 = vpop.f32.mrb[0].mxu0
        %v1844 = vpop.f32.mrb[0].mxu0
        %v1845 = vpop.f32.mrb[0].mxu0
        %1846 = vdwg.mxu0
        %v1847 = vmax.f32 %v1834, 0.0
        %v1848 = vmax.f32 %v1837, 0.0
        %v1849 = vmax.f32 %v1842, 0.0
        %v1850 = vpack.c.bf16 %v1848, %v1847
        %v1851 = vpack.c.bf16 %v1849, %v1849
        %v1852 = vld [vmem:[%s746] sm:$0xf]
        %v1853 = vld [vmem:[%s746 + $0x4] sm:$0xf]
        %v1854 = vld [vmem:[%s746 + $0x8] sm:$0xf]
        %v1855 = vld [vmem:[%s746 + $0xc] sm:$0xf]
        %v1856 = vld [vmem:[%s746 + $0x10] sm:$0xf]
        %v1857 = vld [vmem:[%s746 + $0x14] sm:$0xf]
        %v1858 = vld [vmem:[%s746 + $0x18] sm:$0xf]
        %v1859 = vld [vmem:[%s746 + $0x1c] sm:$0xf]
        %v1860 = vld [vmem:[%s749] sm:$0x1]
        %v1862 = vlaneseq
        %v1863 = vshrl.u32 %v1862, 7
        %v1864 = vsub.s32 0, %v1863
        %v1865 = vrot.slane %v1860, %v1864
        %v1875 = vunpack.c.l.b16 %v1852
        %v1876 = vunpack.c.l.b16 %v1853
        %v1877 = vunpack.c.l.b16 %v1854
        %v1878 = vunpack.c.l.b16 %v1855
        %v1879 = vunpack.c.l.b16 %v1856
        %v1880 = vunpack.c.l.b16 %v1857
        %v1881 = vunpack.c.l.b16 %v1858
        %v1882 = vunpack.c.l.b16 %v1859
        %v1883 = vpack.c.b16 %v1876, %v1875
        %v1884 = vpack.c.b16 %v1878, %v1877
        %v1885 = vpack.c.b16 %v1880, %v1879
        %v1886 = vpack.c.b16 %v1882, %v1881
        %vm1891 = vcmask 523264
        %v1893 = vsel %vm1891, %v1850, 0
        %v1896 = vsel %vm1891, %v1851, 0
        %1898 = vmatprep.subr.bf16.mxu0 0
        %1899 = vmatpush1.bf16.msra.mxu0 %v1883
        %1900 = vmatprep.subr.bf16.mxu0 0
        %1901 = vmatpush1.bf16.msra.mxu0 %v1884
        %1902 = vmatprep.subr.bf16.mxu0 0
        %1903 = vmatpush1.bf16.msra.mxu0 %v1885
        %1904 = vmatprep.subr.bf16.mxu0 0
        %1905 = vmatpush1.bf16.msra.mxu0 %v1886
        %1906 = vmatprep.subr.bf16.mxu0 0
        %1907 = vmatpush1.bf16.msra.mxu0 0
        %1908 = vmatprep.subr.bf16.mxu0 0
        %1909 = vmatpush1.bf16.msra.mxu0 0
        %1910 = vmatprep.subr.bf16.mxu0 0
        %1911 = vmatpush1.bf16.msra.mxu0 0
        %1912 = vmatprep.subr.bf16.mxu0 0
        %1913 = vmatpush1.bf16.msra.mxu0 0
        %1914 = vmatprep.subr.bf16.mxu0 0
        %1915 = vmatpush1.bf16.msra.mxu0 0
        %1916 = vmatprep.subr.bf16.mxu0 0
        %1917 = vmatpush1.bf16.msra.mxu0 0
        %1918 = vmatprep.subr.bf16.mxu0 0
        %1919 = vmatpush1.bf16.msra.mxu0 0
        %1920 = vmatprep.subr.bf16.mxu0 0
        %1921 = vmatpush1.bf16.msra.mxu0 0
        %1922 = vmatprep.subr.bf16.mxu0 0
        %1923 = vmatpush1.bf16.msra.mxu0 0
        %1924 = vmatprep.subr.bf16.mxu0 0
        %1925 = vmatpush1.bf16.msra.mxu0 0
        %1926 = vmatprep.subr.bf16.mxu0 0
        %1927 = vmatpush1.bf16.msra.mxu0 0
        %1928 = vmatprep.subr.bf16.mxu0 0
        %1929 = vmatpush1.bf16.msra.mxu0 0
        %1930 = vmatprep.mubr.bf16.mxu0 0
        %1931 = vmatmul.mubr.bf16.gmra.mrb[0].mxu0 %v1893
        %v1932 = vpop.f32.mrb[0].mxu0
        %v1933 = vadd.f32 %v1865, %v1932
        %v1934 = vpop.f32.mrb[0].mxu0
        %v1935 = vpop.f32.mrb[0].mxu0
        %v1936 = vadd.f32 %v1865, %v1935
        %v1937 = vpop.f32.mrb[0].mxu0
        %1938 = vmatprep.mubr.bf16.mxu0 0
        %1939 = vmatmul.mubr.bf16.gmra.mrb[0].mxu0 %v1896
        %v1940 = vpop.f32.mrb[0].mxu0
        %v1941 = vadd.f32 %v1865, %v1940
        %v1942 = vpop.f32.mrb[0].mxu0
        %v1943 = vpop.f32.mrb[0].mxu0
        %v1944 = vpop.f32.mrb[0].mxu0
        %1945 = vdwg.mxu0
        %v1946 = vadd.f32 %v1706, %v1933
        %v1947 = vadd.f32 %v1707, %v1936
        %v1948 = vadd.f32 %v1708, %v1941
        %1949 = vst.msk [vmem:[#allocation2] sm:$0xff] %vm768, %v1946
        %1950 = vst.msk [vmem:[#allocation2 + $0x8] sm:$0xff] %vm768, %v1947
        %1951 = vst.msk [vmem:[#allocation2 + $0x10] sm:$0x1] %vm775, %v1948
        %p1952 = scmp.eq.s32.totalorder %s36, 1
        // Predicated region
        $region93: #{vit_forward.3} parent=87 // pred_check
          %p1953 = pneg %p1952
        $region94: #{vit_forward.3} parent=87 // pred_check_branch
          %1955 = sbr.rel (%p1953) target = $region96
        $region95: #{vit_forward.3} parent=87 // pred_region
          %v1956 = vld [vmem:[%s13] sm:$0x1]
          %v1957 = vld [vmem:[%s14] sm:$0x1]
          %v1958 = vsel %vm775, %v1946, 0.0
          %1959 = vadd.xlane.f32.xlu0 %v1958
          %v1960 = vpop.xlane.xlu0 %1959
          %v1961 = vmul.f32 %v1960, %v779
          %v1962 = vsub.f32 %v1946, %v1961
          %v1963 = vmul.f32 %v1962, %v1962
          %v1964 = vsel %vm775, %v1963, 0.0
          %1965 = vadd.xlane.f32.xlu0 %v1964
          %v1966 = vpop.xlane.xlu0 %1965
          %v1967 = vmul.f32 %v1966, %v779
          %v1968 = vadd.f32 %v1967, 1e-05
          %v1969 = vrsqrt.pop %v1968
          %v1970 = vmul.f32 %v1962, %v1969
          %v1971 = vmul.f32 %v1970, %v1956
          %v1972 = vadd.f32 %v1971, %v1957
          %v1973 = vpack.c.bf16 %v1972, %v1972
          %v1974 = vld [vmem:[%s15] sm:$0xf]
          %v1975 = vld [vmem:[%s15 + $0x4] sm:$0xf]
          %v1976 = vld [vmem:[%s15 + $0x8] sm:$0xf]
          %v1977 = vld [vmem:[%s15 + $0xc] sm:$0xf]
          %v1978 = vld [vmem:[%s16] sm:$0x1]
          %v1983 = vunpack.c.l.b16 %v1974
          %v1984 = vunpack.c.l.b16 %v1975
          %v1985 = vunpack.c.l.b16 %v1976
          %v1986 = vunpack.c.l.b16 %v1977
          %v1987 = vpack.c.b16 %v1984, %v1983
          %v1988 = vpack.c.b16 %v1986, %v1985
          %v1992 = vsel %vm768, %v1973, 0
          %1994 = vmatprep.subr.bf16.mxu0 0
          %1995 = vmatpush1.bf16.msra.mxu0 %v1987
          %1996 = vmatprep.subr.bf16.mxu0 0
          %1997 = vmatpush1.bf16.msra.mxu0 %v1988
          %1998 = vmatprep.subr.bf16.mxu0 0
          %1999 = vmatpush1.bf16.msra.mxu0 0
          %2000 = vmatprep.subr.bf16.mxu0 0
          %2001 = vmatpush1.bf16.msra.mxu0 0
          %2002 = vmatprep.subr.bf16.mxu0 0
          %2003 = vmatpush1.bf16.msra.mxu0 0
          %2004 = vmatprep.subr.bf16.mxu0 0
          %2005 = vmatpush1.bf16.msra.mxu0 0
          %2006 = vmatprep.subr.bf16.mxu0 0
          %2007 = vmatpush1.bf16.msra.mxu0 0
          %2008 = vmatprep.subr.bf16.mxu0 0
          %2009 = vmatpush1.bf16.msra.mxu0 0
          %2010 = vmatprep.subr.bf16.mxu0 0
          %2011 = vmatpush1.bf16.msra.mxu0 0
          %2012 = vmatprep.subr.bf16.mxu0 0
          %2013 = vmatpush1.bf16.msra.mxu0 0
          %2014 = vmatprep.subr.bf16.mxu0 0
          %2015 = vmatpush1.bf16.msra.mxu0 0
          %2016 = vmatprep.subr.bf16.mxu0 0
          %2017 = vmatpush1.bf16.msra.mxu0 0
          %2018 = vmatprep.subr.bf16.mxu0 0
          %2019 = vmatpush1.bf16.msra.mxu0 0
          %2020 = vmatprep.subr.bf16.mxu0 0
          %2021 = vmatpush1.bf16.msra.mxu0 0
          %2022 = vmatprep.subr.bf16.mxu0 0
          %2023 = vmatpush1.bf16.msra.mxu0 0
          %2024 = vmatprep.subr.bf16.mxu0 0
          %2025 = vmatpush1.bf16.msra.mxu0 0
          %2026 = vmatprep.mubr.bf16.mxu0 0
          %2027 = vmatmul.mubr.bf16.gmra.mrb[0].mxu0 %v1992
          %v2028 = vpop.f32.mrb[0].mxu0
          %v2029 = vadd.f32 %v1978, %v2028
          %v2030 = vpop.f32.mrb[0].mxu0
          %v2031 = vpop.f32.mrb[0].mxu0
          %v2032 = vpop.f32.mrb[0].mxu0
          %2033 = vdwg.mxu0
          %vm2034 = vcmask 57344
          %2035 = vst.msk [vmem:[%s700] sm:$0x1] %vm2034, %v2029
        $region96: #{vit_forward.3} parent=87 // pred_fallthru
          _
        %s2036 = sand.u32 %s473, 1
        %s2037 = scalar_lea.sflag [#allocation4], %s2036
        %s2038 = sand.u32 %s473, 1
        %s2039 = scalar_lea.vmem [#allocation3], %s2038
        // Predicated region
        $region97: #{vit_forward.3} parent=87 // pred_check
          %p2040 = pneg %p483
        $region98: #{vit_forward.3} parent=87 // pred_check_branch
          %2042 = sbr.rel (%p2040) target = $region100
        $region99: #{vit_forward.3} parent=87 // pred_region
          %s2044 = ssub.s32 16, 16
          %2045 = vsyncadd %s2037, %s2044
          %s2046 = smul.addr %s35, 16
          %s2047 = scalar_lea.hbm %s17, %s2046
          %s2049 = sshll.u32 %s2039, 4
          %s2050 = int_to_ptr.vmem [resolvable:$true] %s2049
          %2052 = dma.vmem_to_hbm [thread:$0]  %s2050, 16, %s2047, %s2037
        $region100: #{vit_forward.3} parent=87 // pred_fallthru
          _
      $region88: #{vit_forward.3} parent=5 // pred_fallthru
        _
      %p2053 = scmp.le.s32.totalorder 2, %s26
      // Predicated region
      $region101: #{vit_forward.3} parent=5 // pred_check
        %p2054 = pneg %p2053
      $region102: #{vit_forward.3} parent=5 // pred_check_branch
        %2056 = sbr.rel (%p2054) target = $region104
      $region103: #{vit_forward.3} parent=5 // pred_region
        %s2057 = ssub.s32 %s26, 2
        // Predicated region
        $region105: #{vit_forward.3} parent=103 // pred_check
          %p2058 = pneg %p489
        $region106: #{vit_forward.3} parent=103 // pred_check_branch
          %2060 = sbr.rel (%p2058) target = $region108
        $region107: #{vit_forward.3} parent=103 // pred_region
          %s2061 = sand.u32 %s474, 1
          %s2062 = scalar_lea.sflag [#allocation4], %s2061
          %s2063 = sand.u32 %s474, 1
          %s2064 = scalar_lea.vmem [#allocation3], %s2063
          %2065 = dma.done %s2062, 16
        $region108: #{vit_forward.3} parent=103 // pred_fallthru
          _
      $region104: #{vit_forward.3} parent=5 // pred_fallthru
        _
    $region6: #{vit_forward.3} parent=1 // loop_footer
      %s30 = sadd.s32 1, %s26
    $region7: #{vit_forward.3} parent=1 // loop_footer_branch
      %25 = sbr.rel target = $region3
    $region8: #{vit_forward.3} parent=1 // loop_exit
      _
    %2066 = vsyncpa [#allocation4], 1
    %s2067 = scalar_lea.sflag [#allocation4], 1
    %2068 = vsyncpa %s2067, 1

</llo_original>
